<compile_context>
chip_gen: v7x
topology: tpu7x:2x2x1
jax: 0.10.0
libtpu: 0.0.40
codegen_flags: <defaults>
</compile_context>

<pallas_src>
import functools
import math

import jax
import jax.numpy as jnp
from jax.experimental import pallas as pl
from jax.experimental.pallas import tpu as pltpu


def _encoder_layer_kernel(
    x_ref, wq_ref, wk_ref, wv_ref, wo_ref,
    bq_ref, bk_ref, bv_ref, bo_ref, gamma_ref, beta_ref,
    o_ref, *, n_heads, d_k, scale, inv_nm1, eps, mxu_dtype,
):
    b_blk, seq, d_model = x_ref.shape
    rows = b_blk * seq

    # Whole batch block flattened to a (rows, d_model) slab; f32 master copy
    # for the residual / LayerNorm path, mxu_dtype copy to feed the MXU.
    x = x_ref[...].reshape(rows, d_model).astype(jnp.float32)
    x_m = x.astype(mxu_dtype)

    # QKV projections: one K=d_model matmul each over the whole block.
    q = jnp.dot(x_m, wq_ref[...], preferred_element_type=jnp.float32) + bq_ref[...]
    k = jnp.dot(x_m, wk_ref[...], preferred_element_type=jnp.float32) + bk_ref[...]
    v = jnp.dot(x_m, wv_ref[...], preferred_element_type=jnp.float32) + bv_ref[...]

    # Fold 1/sqrt(d_k) into q once; transpose k once (one XLU transpose per
    # grid step instead of one per head); cast MXU operands once.
    q = (q * scale).astype(mxu_dtype)                 # (rows, d_model)
    kt = jnp.transpose(k).astype(mxu_dtype)           # (d_model, rows)
    v = v.astype(mxu_dtype)                           # (rows, d_model)

    # Per (batch-row, head) attention with static sublane/lane slices; head
    # outputs are concatenated so the output projection is ONE full-width
    # matmul with the complete Wo.
    row_outs = []
    for b in range(b_blk):
        r0 = b * seq
        head_outs = []
        for h in range(n_heads):
            hs = h * d_k
            q_bh = q[r0:r0 + seq, hs:hs + d_k]        # (seq, d_k)
            kt_bh = kt[hs:hs + d_k, r0:r0 + seq]      # (d_k, seq)
            v_bh = v[r0:r0 + seq, hs:hs + d_k]        # (seq, d_k)

            # scores = (q/sqrt(d_k)) @ k^T   (canonical contraction, no per-head transpose)
            s = jnp.dot(q_bh, kt_bh, preferred_element_type=jnp.float32)   # (seq, seq)

            # softmax over keys; approx reciprocal goes to the EUP slot.
            m = jnp.max(s, axis=-1, keepdims=True)
            e = jnp.exp(s - m)
            p = e * pl.reciprocal(jnp.sum(e, axis=-1, keepdims=True), approx=True)

            head_outs.append(
                jnp.dot(p.astype(mxu_dtype), v_bh,
                        preferred_element_type=jnp.float32))               # (seq, d_k)
        row_outs.append(jnp.concatenate(head_outs, axis=-1))               # (seq, d_model)
    concat = row_outs[0] if b_blk == 1 else jnp.concatenate(row_outs, axis=0)

    # Single output projection (K = d_model) over the whole block.
    attn = jnp.dot(concat.astype(mxu_dtype), wo_ref[...],
                   preferred_element_type=jnp.float32)

    # Residual (+ output-proj bias); dropout == identity in eval mode.
    res = x + attn + bo_ref[...]

    # LayerNorm variant: beta * (res - mean)/(std + eps) + gamma, unbiased std.
    # Exact reciprocal on this path (it scales the output directly).
    mean = jnp.mean(res, axis=-1, keepdims=True)
    c = res - mean
    var = jnp.sum(c * c, axis=-1, keepdims=True) * inv_nm1
    inv = 1.0 / (jnp.sqrt(var) + eps)
    y = beta_ref[...] * (c * inv) + gamma_ref[...]

    o_ref[...] = y.reshape(b_blk, seq, d_model).astype(o_ref.dtype)


def encoder_layer(x, wq, bq, wk, bk, wv, bv, wo, bo, gamma, beta,
                  *, n_heads, eps=1e-6, batch_block=None,
                  mxu_dtype=jnp.bfloat16):
    """x: (batch, seq, d_model). Weights in (in, out) layout; biases (d_model,).

    mxu_dtype: operand dtype fed to the MXU (accumulation always f32).
    batch_block: batch rows processed per grid step (None -> heuristic that
    keeps >= 2 grid steps when batch >= 2 so both v7x TensorCores are fed).
    """
    batch, seq, d_model = x.shape
    assert d_model % n_heads == 0 and d_model > 1
    d_k = d_model // n_heads

    if batch_block is None:
        batch_block = max(1, batch // 2)
        while batch % batch_block:          # must divide batch exactly
            batch_block -= 1
    assert batch % batch_block == 0
    grid = (batch // batch_block,)

    f32 = jnp.float32
    cast_w = lambda w: w.astype(mxu_dtype)
    row = lambda v_: v_.reshape(1, d_model).astype(f32)

    kernel = functools.partial(
        _encoder_layer_kernel,
        n_heads=n_heads, d_k=d_k,
        scale=1.0 / math.sqrt(d_k),
        inv_nm1=1.0 / (d_model - 1),
        eps=float(eps),
        mxu_dtype=mxu_dtype,
    )

    x_spec = pl.BlockSpec((batch_block, seq, d_model), lambda b: (b, 0, 0))
    w_spec = pl.BlockSpec((d_model, d_model), lambda b: (0, 0))
    v_spec = pl.BlockSpec((1, d_model), lambda b: (0, 0))

    out = pl.pallas_call(
        kernel,
        out_shape=jax.ShapeDtypeStruct((batch, seq, d_model), x.dtype),
        grid_spec=pltpu.PrefetchScalarGridSpec(
            num_scalar_prefetch=0,
            grid=grid,
            in_specs=[
                x_spec,
                w_spec, w_spec, w_spec, w_spec,     # Wq, Wk, Wv, Wo
                v_spec, v_spec, v_spec, v_spec,     # bq, bk, bv, bo
                v_spec, v_spec,                     # gamma, beta
            ],
            out_specs=x_spec,
        ),
        compiler_params=pltpu.CompilerParams(
            dimension_semantics=("parallel",),
            # Within every generation's physical VMEM (v7x per-TC = 64 MiB);
            # far above this workload's needs.
            vmem_limit_bytes=64 * 1024 * 1024,
        ),
    )(x,
      cast_w(wq), cast_w(wk), cast_w(wv), cast_w(wo),
      row(bq), row(bk), row(bv), row(bo), row(gamma), row(beta))
    return out


def encoder_layer_ref(x, wq, bq, wk, bk, wv, bv, wo, bo, gamma, beta,
                      *, n_heads, eps=1e-6):
    """Pure-JAX reference mirroring the PyTorch EncoderLayer (eval, mask=None)."""
    batch, seq, d_model = x.shape
    d_k = d_model // n_heads
    x32 = x.astype(jnp.float32)

    q = x32 @ wq + bq
    k = x32 @ wk + bk
    v = x32 @ wv + bv
    q = q.reshape(batch, seq, n_heads, d_k).transpose(0, 2, 1, 3)
    k = k.reshape(batch, seq, n_heads, d_k).transpose(0, 2, 1, 3)
    v = v.reshape(batch, seq, n_heads, d_k).transpose(0, 2, 1, 3)

    scores = jnp.einsum("bhqd,bhkd->bhqk", q, k) / math.sqrt(d_k)
    # mask=None -> top-k dynamic mask in the PyTorch code has no effect.
    p = jax.nn.softmax(scores, axis=-1)
    o = jnp.einsum("bhqk,bhkd->bhqd", p, v)
    o = o.transpose(0, 2, 1, 3).reshape(batch, seq, d_model)
    o = o @ wo + bo

    res = x32 + o
    mean = jnp.mean(res, axis=-1, keepdims=True)
    std = jnp.std(res, axis=-1, keepdims=True, ddof=1)
    return (beta * (res - mean) / (std + eps) + gamma).astype(x.dtype)


if __name__ == "__main__":
    key = jax.random.PRNGKey(0)
    ks = jax.random.split(key, 12)

    batch, seq, d_model, n_heads = 2, 16, 32, 4   # window_size=16 == seq
    eps = 1e-6

    x = jax.random.normal(ks[0], (batch, seq, d_model), dtype=jnp.float32)

    def w(k):
        return 0.1 * jax.random.normal(k, (d_model, d_model), dtype=jnp.float32)

    def b(k):
        return 0.1 * jax.random.normal(k, (d_model,), dtype=jnp.float32)

    wq, wk_, wv, wo = w(ks[1]), w(ks[2]), w(ks[3]), w(ks[4])
    bq, bk_, bv, bo = b(ks[5]), b(ks[6]), b(ks[7]), b(ks[8])
    # Random gamma/beta so the normalization path is actually exercised
    # (module default gamma=1, beta=0 would make the output trivially constant).
    gamma = 1.0 + 0.1 * jax.random.normal(ks[9], (d_model,), dtype=jnp.float32)
    beta = jax.random.normal(ks[10], (d_model,), dtype=jnp.float32)

    ref = encoder_layer_ref(x, wq, bq, wk_, bk_, wv, bv, wo, bo, gamma, beta,
                            n_heads=n_heads, eps=eps)

    # f32 MXU operands: should match the reference tightly.
    out_f32 = encoder_layer(x, wq, bq, wk_, bk_, wv, bv, wo, bo, gamma, beta,
                            n_heads=n_heads, eps=eps, mxu_dtype=jnp.float32)
    out_f32 = jax.block_until_ready(out_f32)
    assert out_f32.shape == x.shape and out_f32.dtype == x.dtype
    err_f32 = float(jnp.max(jnp.abs(out_f32 - ref)))
    assert err_f32 < 2e-3, f"f32 path mismatch vs reference: {err_f32}"

    # bf16 MXU operands with f32 accumulation (production path on v6e/v7x).
    out_bf16 = encoder_layer(x, wq, bq, wk_, bk_, wv, bv, wo, bo, gamma, beta,
                             n_heads=n_heads, eps=eps, mxu_dtype=jnp.bfloat16)
    out_bf16 = jax.block_until_ready(out_bf16)
    assert out_bf16.shape == x.shape and out_bf16.dtype == x.dtype
    err_bf16 = float(jnp.max(jnp.abs(out_bf16 - ref)))
    assert err_bf16 < 5e-3, f"bf16-MXU path mismatch vs reference: {err_bf16}"

    print("KERNEL_OK")
</pallas_src>

<mosaic_0001>
module attributes {stable_mosaic.version = 11 : i64} {
  func.func @_encoder_layer_kernel(%arg0: i32, %arg1: memref<1x16x32xf32, #tpu.memory_space<vmem>>, %arg2: memref<32x32xf32, #tpu.memory_space<vmem>>, %arg3: memref<32x32xf32, #tpu.memory_space<vmem>>, %arg4: memref<32x32xf32, #tpu.memory_space<vmem>>, %arg5: memref<32x32xf32, #tpu.memory_space<vmem>>, %arg6: memref<1x32xf32, #tpu.memory_space<vmem>>, %arg7: memref<1x32xf32, #tpu.memory_space<vmem>>, %arg8: memref<1x32xf32, #tpu.memory_space<vmem>>, %arg9: memref<1x32xf32, #tpu.memory_space<vmem>>, %arg10: memref<1x32xf32, #tpu.memory_space<vmem>>, %arg11: memref<1x32xf32, #tpu.memory_space<vmem>>, %arg12: memref<1x16x32xf32, #tpu.memory_space<vmem>>) attributes {dimension_semantics = [#tpu.dimension_semantics<parallel>], iteration_bounds = array<i64: 2>, scalar_prefetch = 0 : i64, scratch_operands = 0 : i64, tpu.core_type = #tpu.core_type<tc>, window_params = [{transform_indices = @transform_0, window_bounds = array<i64: 1, 16, 32>}, {pipeline_mode = #tpu.pipeline_mode<synchronous>, transform_indices = @transform_1, window_bounds = array<i64: 32, 32>}, {pipeline_mode = #tpu.pipeline_mode<synchronous>, transform_indices = @transform_2, window_bounds = array<i64: 32, 32>}, {pipeline_mode = #tpu.pipeline_mode<synchronous>, transform_indices = @transform_3, window_bounds = array<i64: 32, 32>}, {pipeline_mode = #tpu.pipeline_mode<synchronous>, transform_indices = @transform_4, window_bounds = array<i64: 32, 32>}, {pipeline_mode = #tpu.pipeline_mode<synchronous>, transform_indices = @transform_5, window_bounds = array<i64: 1, 32>}, {pipeline_mode = #tpu.pipeline_mode<synchronous>, transform_indices = @transform_6, window_bounds = array<i64: 1, 32>}, {pipeline_mode = #tpu.pipeline_mode<synchronous>, transform_indices = @transform_7, window_bounds = array<i64: 1, 32>}, {pipeline_mode = #tpu.pipeline_mode<synchronous>, transform_indices = @transform_8, window_bounds = array<i64: 1, 32>}, {pipeline_mode = #tpu.pipeline_mode<synchronous>, transform_indices = @transform_9, window_bounds = array<i64: 1, 32>}, {pipeline_mode = #tpu.pipeline_mode<synchronous>, transform_indices = @transform_10, window_bounds = array<i64: 1, 32>}, {transform_indices = @transform_11, window_bounds = array<i64: 1, 16, 32>}]} {
    %c0 = arith.constant 0 : index
    %c0_0 = arith.constant 0 : index
    %c0_1 = arith.constant 0 : index
    %0 = vector.load %arg1[%c0, %c0_0, %c0_1] : memref<1x16x32xf32, #tpu.memory_space<vmem>>, vector<1x16x32xf32>
    %1 = vector.shape_cast %0 : vector<1x16x32xf32> to vector<16x32xf32>
    %c0_2 = arith.constant 0 : index
    %c0_3 = arith.constant 0 : index
    %2 = vector.load %arg2[%c0_2, %c0_3] : memref<32x32xf32, #tpu.memory_space<vmem>>, vector<32x32xf32>
    %cst = arith.constant dense<0.000000e+00> : vector<16x32xf32>
    %3 = tpu.matmul %1, %2, %cst {dimension_numbers = #tpu.dot_dimension_numbers<[1], [0], [0], [1], [0, 0, 1, 1], [], []>} : vector<16x32xf32>, vector<32x32xf32>, vector<16x32xf32> -> vector<16x32xf32>
    %c0_4 = arith.constant 0 : index
    %c0_5 = arith.constant 0 : index
    %4 = vector.load %arg6[%c0_4, %c0_5] : memref<1x32xf32, #tpu.memory_space<vmem>>, vector<1x32xf32>
    %5 = vector.broadcast %4 : vector<1x32xf32> to vector<16x32xf32>
    %6 = arith.addf %3, %5 : vector<16x32xf32>
    %c0_6 = arith.constant 0 : index
    %c0_7 = arith.constant 0 : index
    %7 = vector.load %arg3[%c0_6, %c0_7] : memref<32x32xf32, #tpu.memory_space<vmem>>, vector<32x32xf32>
    %cst_8 = arith.constant dense<0.000000e+00> : vector<16x32xf32>
    %8 = tpu.matmul %1, %7, %cst_8 {dimension_numbers = #tpu.dot_dimension_numbers<[1], [0], [0], [1], [0, 0, 1, 1], [], []>} : vector<16x32xf32>, vector<32x32xf32>, vector<16x32xf32> -> vector<16x32xf32>
    %c0_9 = arith.constant 0 : index
    %c0_10 = arith.constant 0 : index
    %9 = vector.load %arg7[%c0_9, %c0_10] : memref<1x32xf32, #tpu.memory_space<vmem>>, vector<1x32xf32>
    %10 = vector.broadcast %9 : vector<1x32xf32> to vector<16x32xf32>
    %11 = arith.addf %8, %10 : vector<16x32xf32>
    %c0_11 = arith.constant 0 : index
    %c0_12 = arith.constant 0 : index
    %12 = vector.load %arg4[%c0_11, %c0_12] : memref<32x32xf32, #tpu.memory_space<vmem>>, vector<32x32xf32>
    %cst_13 = arith.constant dense<0.000000e+00> : vector<16x32xf32>
    %13 = tpu.matmul %1, %12, %cst_13 {dimension_numbers = #tpu.dot_dimension_numbers<[1], [0], [0], [1], [0, 0, 1, 1], [], []>} : vector<16x32xf32>, vector<32x32xf32>, vector<16x32xf32> -> vector<16x32xf32>
    %c0_14 = arith.constant 0 : index
    %c0_15 = arith.constant 0 : index
    %14 = vector.load %arg8[%c0_14, %c0_15] : memref<1x32xf32, #tpu.memory_space<vmem>>, vector<1x32xf32>
    %15 = vector.broadcast %14 : vector<1x32xf32> to vector<16x32xf32>
    %16 = arith.addf %13, %15 : vector<16x32xf32>
    %cst_16 = arith.constant 0.353553385 : f32
    %17 = vector.broadcast %cst_16 : f32 to vector<16x32xf32>
    %18 = arith.mulf %6, %17 : vector<16x32xf32>
    %19 = tpu.transpose %11, [1, 0] : vector<16x32xf32> -> vector<32x16xf32>
    %20 = vector.extract_strided_slice %18 {offsets = [0, 0], sizes = [16, 8], strides = [1, 1]} : vector<16x32xf32> to vector<16x8xf32>
    %21 = vector.extract_strided_slice %19 {offsets = [0, 0], sizes = [8, 16], strides = [1, 1]} : vector<32x16xf32> to vector<8x16xf32>
    %22 = vector.extract_strided_slice %16 {offsets = [0, 0], sizes = [16, 8], strides = [1, 1]} : vector<16x32xf32> to vector<16x8xf32>
    %cst_17 = arith.constant dense<0.000000e+00> : vector<16x16xf32>
    %23 = tpu.matmul %20, %21, %cst_17 {dimension_numbers = #tpu.dot_dimension_numbers<[1], [0], [0], [1], [0, 0, 1, 1], [], []>} : vector<16x8xf32>, vector<8x16xf32>, vector<16x16xf32> -> vector<16x16xf32>
    %cst_18 = arith.constant dense<0xFF800000> : vector<16xf32>
    %24 = vector.multi_reduction <maximumf>, %23, %cst_18 [1] : vector<16x16xf32> to vector<16xf32>
    %25 = vector.shape_cast %24 : vector<16xf32> to vector<16x1xf32>
    %26 = vector.broadcast %25 : vector<16x1xf32> to vector<16x16xf32>
    %27 = arith.subf %23, %26 : vector<16x16xf32>
    %28 = math.exp %27 : vector<16x16xf32>
    %cst_19 = arith.constant dense<0.000000e+00> : vector<16xf32>
    %29 = vector.multi_reduction <add>, %28, %cst_19 [1] : vector<16x16xf32> to vector<16xf32>
    %30 = vector.shape_cast %29 : vector<16xf32> to vector<16x1xf32>
    %31 = tpu.reciprocal %30 {approx = true} : vector<16x1xf32> -> vector<16x1xf32>
    %32 = vector.broadcast %31 : vector<16x1xf32> to vector<16x16xf32>
    %33 = arith.mulf %28, %32 : vector<16x16xf32>
    %cst_20 = arith.constant dense<0.000000e+00> : vector<16x8xf32>
    %34 = tpu.matmul %33, %22, %cst_20 {dimension_numbers = #tpu.dot_dimension_numbers<[1], [0], [0], [1], [0, 0, 1, 1], [], []>} : vector<16x16xf32>, vector<16x8xf32>, vector<16x8xf32> -> vector<16x8xf32>
    %35 = vector.extract_strided_slice %18 {offsets = [0, 8], sizes = [16, 8], strides = [1, 1]} : vector<16x32xf32> to vector<16x8xf32>
    %36 = vector.extract_strided_slice %19 {offsets = [8, 0], sizes = [8, 16], strides = [1, 1]} : vector<32x16xf32> to vector<8x16xf32>
    %37 = vector.extract_strided_slice %16 {offsets = [0, 8], sizes = [16, 8], strides = [1, 1]} : vector<16x32xf32> to vector<16x8xf32>
    %cst_21 = arith.constant dense<0.000000e+00> : vector<16x16xf32>
    %38 = tpu.matmul %35, %36, %cst_21 {dimension_numbers = #tpu.dot_dimension_numbers<[1], [0], [0], [1], [0, 0, 1, 1], [], []>} : vector<16x8xf32>, vector<8x16xf32>, vector<16x16xf32> -> vector<16x16xf32>
    %cst_22 = arith.constant dense<0xFF800000> : vector<16xf32>
    %39 = vector.multi_reduction <maximumf>, %38, %cst_22 [1] : vector<16x16xf32> to vector<16xf32>
    %40 = vector.shape_cast %39 : vector<16xf32> to vector<16x1xf32>
    %41 = vector.broadcast %40 : vector<16x1xf32> to vector<16x16xf32>
    %42 = arith.subf %38, %41 : vector<16x16xf32>
    %43 = math.exp %42 : vector<16x16xf32>
    %cst_23 = arith.constant dense<0.000000e+00> : vector<16xf32>
    %44 = vector.multi_reduction <add>, %43, %cst_23 [1] : vector<16x16xf32> to vector<16xf32>
    %45 = vector.shape_cast %44 : vector<16xf32> to vector<16x1xf32>
    %46 = tpu.reciprocal %45 {approx = true} : vector<16x1xf32> -> vector<16x1xf32>
    %47 = vector.broadcast %46 : vector<16x1xf32> to vector<16x16xf32>
    %48 = arith.mulf %43, %47 : vector<16x16xf32>
    %cst_24 = arith.constant dense<0.000000e+00> : vector<16x8xf32>
    %49 = tpu.matmul %48, %37, %cst_24 {dimension_numbers = #tpu.dot_dimension_numbers<[1], [0], [0], [1], [0, 0, 1, 1], [], []>} : vector<16x16xf32>, vector<16x8xf32>, vector<16x8xf32> -> vector<16x8xf32>
    %50 = vector.extract_strided_slice %18 {offsets = [0, 16], sizes = [16, 8], strides = [1, 1]} : vector<16x32xf32> to vector<16x8xf32>
    %51 = vector.extract_strided_slice %19 {offsets = [16, 0], sizes = [8, 16], strides = [1, 1]} : vector<32x16xf32> to vector<8x16xf32>
    %52 = vector.extract_strided_slice %16 {offsets = [0, 16], sizes = [16, 8], strides = [1, 1]} : vector<16x32xf32> to vector<16x8xf32>
    %cst_25 = arith.constant dense<0.000000e+00> : vector<16x16xf32>
    %53 = tpu.matmul %50, %51, %cst_25 {dimension_numbers = #tpu.dot_dimension_numbers<[1], [0], [0], [1], [0, 0, 1, 1], [], []>} : vector<16x8xf32>, vector<8x16xf32>, vector<16x16xf32> -> vector<16x16xf32>
    %cst_26 = arith.constant dense<0xFF800000> : vector<16xf32>
    %54 = vector.multi_reduction <maximumf>, %53, %cst_26 [1] : vector<16x16xf32> to vector<16xf32>
    %55 = vector.shape_cast %54 : vector<16xf32> to vector<16x1xf32>
    %56 = vector.broadcast %55 : vector<16x1xf32> to vector<16x16xf32>
    %57 = arith.subf %53, %56 : vector<16x16xf32>
    %58 = math.exp %57 : vector<16x16xf32>
    %cst_27 = arith.constant dense<0.000000e+00> : vector<16xf32>
    %59 = vector.multi_reduction <add>, %58, %cst_27 [1] : vector<16x16xf32> to vector<16xf32>
    %60 = vector.shape_cast %59 : vector<16xf32> to vector<16x1xf32>
    %61 = tpu.reciprocal %60 {approx = true} : vector<16x1xf32> -> vector<16x1xf32>
    %62 = vector.broadcast %61 : vector<16x1xf32> to vector<16x16xf32>
    %63 = arith.mulf %58, %62 : vector<16x16xf32>
    %cst_28 = arith.constant dense<0.000000e+00> : vector<16x8xf32>
    %64 = tpu.matmul %63, %52, %cst_28 {dimension_numbers = #tpu.dot_dimension_numbers<[1], [0], [0], [1], [0, 0, 1, 1], [], []>} : vector<16x16xf32>, vector<16x8xf32>, vector<16x8xf32> -> vector<16x8xf32>
    %65 = vector.extract_strided_slice %18 {offsets = [0, 24], sizes = [16, 8], strides = [1, 1]} : vector<16x32xf32> to vector<16x8xf32>
    %66 = vector.extract_strided_slice %19 {offsets = [24, 0], sizes = [8, 16], strides = [1, 1]} : vector<32x16xf32> to vector<8x16xf32>
    %67 = vector.extract_strided_slice %16 {offsets = [0, 24], sizes = [16, 8], strides = [1, 1]} : vector<16x32xf32> to vector<16x8xf32>
    %cst_29 = arith.constant dense<0.000000e+00> : vector<16x16xf32>
    %68 = tpu.matmul %65, %66, %cst_29 {dimension_numbers = #tpu.dot_dimension_numbers<[1], [0], [0], [1], [0, 0, 1, 1], [], []>} : vector<16x8xf32>, vector<8x16xf32>, vector<16x16xf32> -> vector<16x16xf32>
    %cst_30 = arith.constant dense<0xFF800000> : vector<16xf32>
    %69 = vector.multi_reduction <maximumf>, %68, %cst_30 [1] : vector<16x16xf32> to vector<16xf32>
    %70 = vector.shape_cast %69 : vector<16xf32> to vector<16x1xf32>
    %71 = vector.broadcast %70 : vector<16x1xf32> to vector<16x16xf32>
    %72 = arith.subf %68, %71 : vector<16x16xf32>
    %73 = math.exp %72 : vector<16x16xf32>
    %cst_31 = arith.constant dense<0.000000e+00> : vector<16xf32>
    %74 = vector.multi_reduction <add>, %73, %cst_31 [1] : vector<16x16xf32> to vector<16xf32>
    %75 = vector.shape_cast %74 : vector<16xf32> to vector<16x1xf32>
    %76 = tpu.reciprocal %75 {approx = true} : vector<16x1xf32> -> vector<16x1xf32>
    %77 = vector.broadcast %76 : vector<16x1xf32> to vector<16x16xf32>
    %78 = arith.mulf %73, %77 : vector<16x16xf32>
    %cst_32 = arith.constant dense<0.000000e+00> : vector<16x8xf32>
    %79 = tpu.matmul %78, %67, %cst_32 {dimension_numbers = #tpu.dot_dimension_numbers<[1], [0], [0], [1], [0, 0, 1, 1], [], []>} : vector<16x16xf32>, vector<16x8xf32>, vector<16x8xf32> -> vector<16x8xf32>
    %80 = tpu.concatenate %34, %49, %64, %79 in 1 : vector<16x8xf32>, vector<16x8xf32>, vector<16x8xf32>, vector<16x8xf32> -> vector<16x32xf32>
    %c0_33 = arith.constant 0 : index
    %c0_34 = arith.constant 0 : index
    %81 = vector.load %arg5[%c0_33, %c0_34] : memref<32x32xf32, #tpu.memory_space<vmem>>, vector<32x32xf32>
    %cst_35 = arith.constant dense<0.000000e+00> : vector<16x32xf32>
    %82 = tpu.matmul %80, %81, %cst_35 {dimension_numbers = #tpu.dot_dimension_numbers<[1], [0], [0], [1], [0, 0, 1, 1], [], []>} : vector<16x32xf32>, vector<32x32xf32>, vector<16x32xf32> -> vector<16x32xf32>
    %83 = arith.addf %1, %82 : vector<16x32xf32>
    %c0_36 = arith.constant 0 : index
    %c0_37 = arith.constant 0 : index
    %84 = vector.load %arg9[%c0_36, %c0_37] : memref<1x32xf32, #tpu.memory_space<vmem>>, vector<1x32xf32>
    %85 = vector.broadcast %84 : vector<1x32xf32> to vector<16x32xf32>
    %86 = arith.addf %83, %85 : vector<16x32xf32>
    %cst_38 = arith.constant dense<0.000000e+00> : vector<16xf32>
    %87 = vector.multi_reduction <add>, %86, %cst_38 [1] : vector<16x32xf32> to vector<16xf32>
    %88 = vector.shape_cast %87 : vector<16xf32> to vector<16x1xf32>
    %cst_39 = arith.constant 3.200000e+01 : f32
    %89 = vector.broadcast %cst_39 : f32 to vector<16x1xf32>
    %90 = arith.divf %88, %89 : vector<16x1xf32>
    %91 = vector.broadcast %90 : vector<16x1xf32> to vector<16x32xf32>
    %92 = arith.subf %86, %91 : vector<16x32xf32>
    %93 = arith.mulf %92, %92 : vector<16x32xf32>
    %cst_40 = arith.constant dense<0.000000e+00> : vector<16xf32>
    %94 = vector.multi_reduction <add>, %93, %cst_40 [1] : vector<16x32xf32> to vector<16xf32>
    %95 = vector.shape_cast %94 : vector<16xf32> to vector<16x1xf32>
    %cst_41 = arith.constant 0.0322580636 : f32
    %96 = vector.broadcast %cst_41 : f32 to vector<16x1xf32>
    %97 = arith.mulf %95, %96 : vector<16x1xf32>
    %98 = math.sqrt %97 : vector<16x1xf32>
    %cst_42 = arith.constant 9.99999997E-7 : f32
    %99 = vector.broadcast %cst_42 : f32 to vector<16x1xf32>
    %100 = arith.addf %98, %99 : vector<16x1xf32>
    %cst_43 = arith.constant 1.000000e+00 : f32
    %101 = vector.broadcast %cst_43 : f32 to vector<16x1xf32>
    %102 = arith.divf %101, %100 : vector<16x1xf32>
    %c0_44 = arith.constant 0 : index
    %c0_45 = arith.constant 0 : index
    %103 = vector.load %arg11[%c0_44, %c0_45] : memref<1x32xf32, #tpu.memory_space<vmem>>, vector<1x32xf32>
    %104 = vector.broadcast %102 : vector<16x1xf32> to vector<16x32xf32>
    %105 = arith.mulf %92, %104 : vector<16x32xf32>
    %106 = vector.broadcast %103 : vector<1x32xf32> to vector<16x32xf32>
    %107 = arith.mulf %106, %105 : vector<16x32xf32>
    %c0_46 = arith.constant 0 : index
    %c0_47 = arith.constant 0 : index
    %108 = vector.load %arg10[%c0_46, %c0_47] : memref<1x32xf32, #tpu.memory_space<vmem>>, vector<1x32xf32>
    %109 = vector.broadcast %108 : vector<1x32xf32> to vector<16x32xf32>
    %110 = arith.addf %107, %109 : vector<16x32xf32>
    %111 = vector.shape_cast %110 : vector<16x32xf32> to vector<1x16x32xf32>
    %c0_48 = arith.constant 0 : index
    %c0_49 = arith.constant 0 : index
    %c0_50 = arith.constant 0 : index
    %112 = vector.load %arg12[%c0_48, %c0_49, %c0_50] : memref<1x16x32xf32, #tpu.memory_space<vmem>>, vector<1x16x32xf32>
    tpu.vector_store %arg12[%c0_48, %c0_49, %c0_50], %111 {strides = array<i32>} : memref<1x16x32xf32, #tpu.memory_space<vmem>>, vector<1x16x32xf32>,
    return
  }
  func.func @transform_0(%arg0: i32) -> (i32, i32, i32) {
    %c0_i32 = arith.constant 0 : i32
    %c0_i32_0 = arith.constant 0 : i32
    %c0_i32_1 = arith.constant 0 : i32
    return %arg0, %c0_i32, %c0_i32_0 : i32, i32, i32
  }
  func.func @transform_1(%arg0: i32) -> (i32, i32) {
    %c0_i32 = arith.constant 0 : i32
    %c0_i32_0 = arith.constant 0 : i32
    %c0_i32_1 = arith.constant 0 : i32
    return %c0_i32, %c0_i32_0 : i32, i32
  }
  func.func @transform_2(%arg0: i32) -> (i32, i32) {
    %c0_i32 = arith.constant 0 : i32
    %c0_i32_0 = arith.constant 0 : i32
    %c0_i32_1 = arith.constant 0 : i32
    return %c0_i32, %c0_i32_0 : i32, i32
  }
  func.func @transform_3(%arg0: i32) -> (i32, i32) {
    %c0_i32 = arith.constant 0 : i32
    %c0_i32_0 = arith.constant 0 : i32
    %c0_i32_1 = arith.constant 0 : i32
    return %c0_i32, %c0_i32_0 : i32, i32
  }
  func.func @transform_4(%arg0: i32) -> (i32, i32) {
    %c0_i32 = arith.constant 0 : i32
    %c0_i32_0 = arith.constant 0 : i32
    %c0_i32_1 = arith.constant 0 : i32
    return %c0_i32, %c0_i32_0 : i32, i32
  }
  func.func @transform_5(%arg0: i32) -> (i32, i32) {
    %c0_i32 = arith.constant 0 : i32
    %c0_i32_0 = arith.constant 0 : i32
    %c0_i32_1 = arith.constant 0 : i32
    return %c0_i32, %c0_i32_0 : i32, i32
  }
  func.func @transform_6(%arg0: i32) -> (i32, i32) {
    %c0_i32 = arith.constant 0 : i32
    %c0_i32_0 = arith.constant 0 : i32
    %c0_i32_1 = arith.constant 0 : i32
    return %c0_i32, %c0_i32_0 : i32, i32
  }
  func.func @transform_7(%arg0: i32) -> (i32, i32) {
    %c0_i32 = arith.constant 0 : i32
    %c0_i32_0 = arith.constant 0 : i32
    %c0_i32_1 = arith.constant 0 : i32
    return %c0_i32, %c0_i32_0 : i32, i32
  }
  func.func @transform_8(%arg0: i32) -> (i32, i32) {
    %c0_i32 = arith.constant 0 : i32
    %c0_i32_0 = arith.constant 0 : i32
    %c0_i32_1 = arith.constant 0 : i32
    return %c0_i32, %c0_i32_0 : i32, i32
  }
  func.func @transform_9(%arg0: i32) -> (i32, i32) {
    %c0_i32 = arith.constant 0 : i32
    %c0_i32_0 = arith.constant 0 : i32
    %c0_i32_1 = arith.constant 0 : i32
    return %c0_i32, %c0_i32_0 : i32, i32
  }
  func.func @transform_10(%arg0: i32) -> (i32, i32) {
    %c0_i32 = arith.constant 0 : i32
    %c0_i32_0 = arith.constant 0 : i32
    %c0_i32_1 = arith.constant 0 : i32
    return %c0_i32, %c0_i32_0 : i32, i32
  }
  func.func @transform_11(%arg0: i32) -> (i32, i32, i32) {
    %c0_i32 = arith.constant 0 : i32
    %c0_i32_0 = arith.constant 0 : i32
    %c0_i32_1 = arith.constant 0 : i32
    return %arg0, %c0_i32, %c0_i32_0 : i32, i32, i32
  }
}

</mosaic_0001>

<llo_original>
// kernel: tpu_custom_call.1
$region0: #{tpu_custom_call.1}
  #allocation0 [shape = 'u32[]', space=smem, size = 0x4, offset = 0x4, fixed_abs, tag = 'smem constant byte address 0x4 - core index']
  #allocation1 [shape = 'u32[144,128]{1,0:T(1,128)}', space=vmem, size = 0x12000, scoped, tag = 'internal scratch']
  %s0 = inlined_call_operand.hbm [shape: f32[2,16,32], index: 0, kind: input, shape index: {}]
  %s1 = inlined_call_operand.hbm [shape: f32[32,32], index: 1, kind: input, shape index: {}]
  %s2 = inlined_call_operand.hbm [shape: f32[32,32], index: 2, kind: input, shape index: {}]
  %s3 = inlined_call_operand.hbm [shape: f32[32,32], index: 3, kind: input, shape index: {}]
  %s4 = inlined_call_operand.hbm [shape: f32[32,32], index: 4, kind: input, shape index: {}]
  %s5 = inlined_call_operand.hbm [shape: f32[1,32], index: 5, kind: input, shape index: {}]
  %s6 = inlined_call_operand.hbm [shape: f32[1,32], index: 6, kind: input, shape index: {}]
  %s7 = inlined_call_operand.hbm [shape: f32[1,32], index: 7, kind: input, shape index: {}]
  %s8 = inlined_call_operand.hbm [shape: f32[1,32], index: 8, kind: input, shape index: {}]
  %s9 = inlined_call_operand.hbm [shape: f32[1,32], index: 9, kind: input, shape index: {}]
  %s10 = inlined_call_operand.hbm [shape: f32[1,32], index: 10, kind: input, shape index: {}]
  %s11 = inlined_call_operand.hbm [shape: f32[2,16,32], index: 11, kind: output, shape index: {}]
  %s12 = sld [smem:[#allocation0]]
  $region121: #{tpu_custom_call.1} parent=0
    _
  %s14 = ssub.s32 1, %s12
  %s15 = scalar_select 0, %s14, %s12
  $region1: #{tpu_custom_call.1} parent=0
    #allocation2 [shape = 'u8[16384]{0}', space=vmem, size = 0x4000, scoped, tag = 'input window, operand 0']
    #allocation3 [shape = 's32[2]{0}', space=sflag, size = 0x8, scoped, tag = 'scoped memory for tpu_custom_call.1']
    #allocation4 [shape = 's32[2]{0}', space=sflag, size = 0x8, scoped, tag = 'scoped memory for tpu_custom_call.1']
    #allocation5 [shape = 'u8[16384]{0}', space=vmem, size = 0x4000, scoped, tag = 'input window, operand 1, single buffered']
    #allocation6 [shape = 's32[1]{0}', space=sflag, size = 0x4, scoped, tag = 'scoped memory for tpu_custom_call.1']
    #allocation7 [shape = 'u8[16384]{0}', space=vmem, size = 0x4000, scoped, tag = 'input window, operand 2, single buffered']
    #allocation8 [shape = 'u8[16384]{0}', space=vmem, size = 0x4000, scoped, tag = 'input window, operand 3, single buffered']
    #allocation9 [shape = 's32[1]{0}', space=sflag, size = 0x4, scoped, tag = 'scoped memory for tpu_custom_call.1']
    #allocation10 [shape = 'u8[16384]{0}', space=vmem, size = 0x4000, scoped, tag = 'input window, operand 4, single buffered']
    #allocation11 [shape = 'u8[512]{0}', space=vmem, size = 0x400, scoped, tag = 'input window, operand 5, single buffered']
    #allocation12 [shape = 's32[1]{0}', space=sflag, size = 0x4, scoped, tag = 'scoped memory for tpu_custom_call.1']
    #allocation13 [shape = 'u8[512]{0}', space=vmem, size = 0x400, scoped, tag = 'input window, operand 6, single buffered']
    #allocation14 [shape = 'u8[512]{0}', space=vmem, size = 0x400, scoped, tag = 'input window, operand 7, single buffered']
    #allocation15 [shape = 's32[1]{0}', space=sflag, size = 0x4, scoped, tag = 'scoped memory for tpu_custom_call.1']
    #allocation16 [shape = 'u8[512]{0}', space=vmem, size = 0x400, scoped, tag = 'input window, operand 8, single buffered']
    #allocation17 [shape = 'u8[512]{0}', space=vmem, size = 0x400, scoped, tag = 'input window, operand 9, single buffered']
    #allocation18 [shape = 's32[1]{0}', space=sflag, size = 0x4, scoped, tag = 'scoped memory for tpu_custom_call.1']
    #allocation19 [shape = 'u8[512]{0}', space=vmem, size = 0x400, scoped, tag = 'input window, operand 10, single buffered']
    #allocation20 [shape = 'u8[16384]{0}', space=vmem, size = 0x4000, scoped, tag = 'output window, operand 0']
    %16 = vsyncpa [#allocation3], 0
    %s17 = scalar_lea.sflag [#allocation3], 1
    %18 = vsyncpa %s17, 0
    %19 = vsyncpa [#allocation6], 0
    %20 = vsyncpa [#allocation9], 0
    %21 = vsyncpa [#allocation12], 0
    %22 = vsyncpa [#allocation15], 0
    %23 = vsyncpa [#allocation18], 0
    %24 = vsyncpa [#allocation4], 0
    %s25 = scalar_lea.sflag [#allocation4], 1
    %26 = vsyncpa %s25, 0
    loop: start=0, step=1, limit=4
    $region2: #{tpu_custom_call.1} parent=1 // loop_pre_header
      _
    $region3: #{tpu_custom_call.1} parent=1 // loop_header
      %s28 = sphi 0, %s32
      %p29 = scmp.ge.s32.totalorder %s28, 4
      %s38 = sphi 0, %s40
      %s41 = sphi 0, %s38
      %s42 = sphi 0, %s41
      %s58 = sphi 0, %s42
      %s62 = sphi 0, %s62
      %s64 = sphi 0, %s62
      %s65 = sphi 0, %s64
      %s79 = sphi 0, %s65
      %s83 = sphi 0, %s83
      %s85 = sphi 0, %s83
      %s86 = sphi 0, %s85
      %s100 = sphi 0, %s86
      %s104 = sphi 0, %s104
      %s106 = sphi 0, %s104
      %s107 = sphi 0, %s106
      %s121 = sphi 0, %s107
      %s125 = sphi 0, %s125
      %s127 = sphi 0, %s125
      %s128 = sphi 0, %s127
      %s142 = sphi 0, %s128
      %s146 = sphi 0, %s146
      %s148 = sphi 0, %s146
      %s149 = sphi 0, %s148
      %s163 = sphi 0, %s149
      %s167 = sphi 0, %s167
      %s169 = sphi 0, %s167
      %s170 = sphi 0, %s169
      %s184 = sphi 0, %s170
      %s188 = sphi 0, %s188
      %s190 = sphi 0, %s188
      %s191 = sphi 0, %s190
      %s205 = sphi 0, %s191
      %s209 = sphi 0, %s209
      %s211 = sphi 0, %s209
      %s212 = sphi 0, %s211
      %s226 = sphi 0, %s212
      %s230 = sphi 0, %s230
      %s232 = sphi 0, %s230
      %s233 = sphi 0, %s232
      %s247 = sphi 0, %s233
      %s251 = sphi 0, %s251
      %s253 = sphi 0, %s251
      %s254 = sphi 0, %s253
      %s268 = sphi 0, %s254
      %s274 = sphi 0, %s276
      %s277 = sphi 0, %s274
      %s278 = sphi 0, %s277
      %s294 = sphi 0, %s278
    $region4: #{tpu_custom_call.1} parent=1 // loop_header_branch
      %31 = sbr.rel (%p29) target = $region8
    $region5: #{tpu_custom_call.1} parent=1 // loop_body
      %s33 = ssub.s32 %s28, 1
      %s34 = ssub.s32 %s28, 2
      %s35 = sadd.s32 %s28, 1
      %s36 = ssub.s32 %s28, %s35
      %p37 = scmp.eq.s32.totalorder %s36, 0
      %s39 = sadd.s32 %s38, 1
      %s40 = scalar_select %p37, %s38, %s39
      %p43 = pneg %p37
      %p44 = scmp.eq.s32.totalorder %s28, 1
      %p45 = por %p43, %p44
      %p46 = scmp.ne.s32.totalorder %s38, %s41
      %p47 = scmp.eq.s32.totalorder %s28, 0
      %p48 = por %p46, %p47
      %p49 = scmp.ne.s32.totalorder %s38, %s41
      %p50 = scmp.eq.s32.totalorder %s33, 1
      %p51 = por %p49, %p50
      %p52 = scmp.ne.s32.totalorder %s41, %s42
      %p53 = scmp.eq.s32.totalorder %s33, 0
      %p54 = por %p52, %p53
      %p55 = scmp.ne.s32.totalorder %s41, %s42
      %p56 = scmp.eq.s32.totalorder %s34, 1
      %p57 = por %p55, %p56
      %p59 = scmp.ne.s32.totalorder %s42, %s58
      %p60 = scmp.eq.s32.totalorder %s34, 0
      %p61 = por %p59, %p60
      %s63 = sadd.s32 %s62, 1
      %p66 = scmp.eq.s32.totalorder %s28, 1
      %p67 = scmp.ne.s32.totalorder %s62, %s64
      %p68 = scmp.eq.s32.totalorder %s28, 0
      %p69 = por %p67, %p68
      %p70 = scmp.ne.s32.totalorder %s62, %s64
      %p71 = scmp.eq.s32.totalorder %s33, 1
      %p72 = por %p70, %p71
      %p73 = scmp.ne.s32.totalorder %s64, %s65
      %p74 = scmp.eq.s32.totalorder %s33, 0
      %p75 = por %p73, %p74
      %p76 = scmp.ne.s32.totalorder %s64, %s65
      %p77 = scmp.eq.s32.totalorder %s34, 1
      %p78 = por %p76, %p77
      %p80 = scmp.ne.s32.totalorder %s65, %s79
      %p81 = scmp.eq.s32.totalorder %s34, 0
      %p82 = por %p80, %p81
      %s84 = sadd.s32 %s83, 1
      %p87 = scmp.eq.s32.totalorder %s28, 1
      %p88 = scmp.ne.s32.totalorder %s83, %s85
      %p89 = scmp.eq.s32.totalorder %s28, 0
      %p90 = por %p88, %p89
      %p91 = scmp.ne.s32.totalorder %s83, %s85
      %p92 = scmp.eq.s32.totalorder %s33, 1
      %p93 = por %p91, %p92
      %p94 = scmp.ne.s32.totalorder %s85, %s86
      %p95 = scmp.eq.s32.totalorder %s33, 0
      %p96 = por %p94, %p95
      %p97 = scmp.ne.s32.totalorder %s85, %s86
      %p98 = scmp.eq.s32.totalorder %s34, 1
      %p99 = por %p97, %p98
      %p101 = scmp.ne.s32.totalorder %s86, %s100
      %p102 = scmp.eq.s32.totalorder %s34, 0
      %p103 = por %p101, %p102
      %s105 = sadd.s32 %s104, 1
      %p108 = scmp.eq.s32.totalorder %s28, 1
      %p109 = scmp.ne.s32.totalorder %s104, %s106
      %p110 = scmp.eq.s32.totalorder %s28, 0
      %p111 = por %p109, %p110
      %p112 = scmp.ne.s32.totalorder %s104, %s106
      %p113 = scmp.eq.s32.totalorder %s33, 1
      %p114 = por %p112, %p113
      %p115 = scmp.ne.s32.totalorder %s106, %s107
      %p116 = scmp.eq.s32.totalorder %s33, 0
      %p117 = por %p115, %p116
      %p118 = scmp.ne.s32.totalorder %s106, %s107
      %p119 = scmp.eq.s32.totalorder %s34, 1
      %p120 = por %p118, %p119
      %p122 = scmp.ne.s32.totalorder %s107, %s121
      %p123 = scmp.eq.s32.totalorder %s34, 0
      %p124 = por %p122, %p123
      %s126 = sadd.s32 %s125, 1
      %p129 = scmp.eq.s32.totalorder %s28, 1
      %p130 = scmp.ne.s32.totalorder %s125, %s127
      %p131 = scmp.eq.s32.totalorder %s28, 0
      %p132 = por %p130, %p131
      %p133 = scmp.ne.s32.totalorder %s125, %s127
      %p134 = scmp.eq.s32.totalorder %s33, 1
      %p135 = por %p133, %p134
      %p136 = scmp.ne.s32.totalorder %s127, %s128
      %p137 = scmp.eq.s32.totalorder %s33, 0
      %p138 = por %p136, %p137
      %p139 = scmp.ne.s32.totalorder %s127, %s128
      %p140 = scmp.eq.s32.totalorder %s34, 1
      %p141 = por %p139, %p140
      %p143 = scmp.ne.s32.totalorder %s128, %s142
      %p144 = scmp.eq.s32.totalorder %s34, 0
      %p145 = por %p143, %p144
      %s147 = sadd.s32 %s146, 1
      %p150 = scmp.eq.s32.totalorder %s28, 1
      %p151 = scmp.ne.s32.totalorder %s146, %s148
      %p152 = scmp.eq.s32.totalorder %s28, 0
      %p153 = por %p151, %p152
      %p154 = scmp.ne.s32.totalorder %s146, %s148
      %p155 = scmp.eq.s32.totalorder %s33, 1
      %p156 = por %p154, %p155
      %p157 = scmp.ne.s32.totalorder %s148, %s149
      %p158 = scmp.eq.s32.totalorder %s33, 0
      %p159 = por %p157, %p158
      %p160 = scmp.ne.s32.totalorder %s148, %s149
      %p161 = scmp.eq.s32.totalorder %s34, 1
      %p162 = por %p160, %p161
      %p164 = scmp.ne.s32.totalorder %s149, %s163
      %p165 = scmp.eq.s32.totalorder %s34, 0
      %p166 = por %p164, %p165
      %s168 = sadd.s32 %s167, 1
      %p171 = scmp.eq.s32.totalorder %s28, 1
      %p172 = scmp.ne.s32.totalorder %s167, %s169
      %p173 = scmp.eq.s32.totalorder %s28, 0
      %p174 = por %p172, %p173
      %p175 = scmp.ne.s32.totalorder %s167, %s169
      %p176 = scmp.eq.s32.totalorder %s33, 1
      %p177 = por %p175, %p176
      %p178 = scmp.ne.s32.totalorder %s169, %s170
      %p179 = scmp.eq.s32.totalorder %s33, 0
      %p180 = por %p178, %p179
      %p181 = scmp.ne.s32.totalorder %s169, %s170
      %p182 = scmp.eq.s32.totalorder %s34, 1
      %p183 = por %p181, %p182
      %p185 = scmp.ne.s32.totalorder %s170, %s184
      %p186 = scmp.eq.s32.totalorder %s34, 0
      %p187 = por %p185, %p186
      %s189 = sadd.s32 %s188, 1
      %p192 = scmp.eq.s32.totalorder %s28, 1
      %p193 = scmp.ne.s32.totalorder %s188, %s190
      %p194 = scmp.eq.s32.totalorder %s28, 0
      %p195 = por %p193, %p194
      %p196 = scmp.ne.s32.totalorder %s188, %s190
      %p197 = scmp.eq.s32.totalorder %s33, 1
      %p198 = por %p196, %p197
      %p199 = scmp.ne.s32.totalorder %s190, %s191
      %p200 = scmp.eq.s32.totalorder %s33, 0
      %p201 = por %p199, %p200
      %p202 = scmp.ne.s32.totalorder %s190, %s191
      %p203 = scmp.eq.s32.totalorder %s34, 1
      %p204 = por %p202, %p203
      %p206 = scmp.ne.s32.totalorder %s191, %s205
      %p207 = scmp.eq.s32.totalorder %s34, 0
      %p208 = por %p206, %p207
      %s210 = sadd.s32 %s209, 1
      %p213 = scmp.eq.s32.totalorder %s28, 1
      %p214 = scmp.ne.s32.totalorder %s209, %s211
      %p215 = scmp.eq.s32.totalorder %s28, 0
      %p216 = por %p214, %p215
      %p217 = scmp.ne.s32.totalorder %s209, %s211
      %p218 = scmp.eq.s32.totalorder %s33, 1
      %p219 = por %p217, %p218
      %p220 = scmp.ne.s32.totalorder %s211, %s212
      %p221 = scmp.eq.s32.totalorder %s33, 0
      %p222 = por %p220, %p221
      %p223 = scmp.ne.s32.totalorder %s211, %s212
      %p224 = scmp.eq.s32.totalorder %s34, 1
      %p225 = por %p223, %p224
      %p227 = scmp.ne.s32.totalorder %s212, %s226
      %p228 = scmp.eq.s32.totalorder %s34, 0
      %p229 = por %p227, %p228
      %s231 = sadd.s32 %s230, 1
      %p234 = scmp.eq.s32.totalorder %s28, 1
      %p235 = scmp.ne.s32.totalorder %s230, %s232
      %p236 = scmp.eq.s32.totalorder %s28, 0
      %p237 = por %p235, %p236
      %p238 = scmp.ne.s32.totalorder %s230, %s232
      %p239 = scmp.eq.s32.totalorder %s33, 1
      %p240 = por %p238, %p239
      %p241 = scmp.ne.s32.totalorder %s232, %s233
      %p242 = scmp.eq.s32.totalorder %s33, 0
      %p243 = por %p241, %p242
      %p244 = scmp.ne.s32.totalorder %s232, %s233
      %p245 = scmp.eq.s32.totalorder %s34, 1
      %p246 = por %p244, %p245
      %p248 = scmp.ne.s32.totalorder %s233, %s247
      %p249 = scmp.eq.s32.totalorder %s34, 0
      %p250 = por %p248, %p249
      %s252 = sadd.s32 %s251, 1
      %p255 = scmp.eq.s32.totalorder %s28, 1
      %p256 = scmp.ne.s32.totalorder %s251, %s253
      %p257 = scmp.eq.s32.totalorder %s28, 0
      %p258 = por %p256, %p257
      %p259 = scmp.ne.s32.totalorder %s251, %s253
      %p260 = scmp.eq.s32.totalorder %s33, 1
      %p261 = por %p259, %p260
      %p262 = scmp.ne.s32.totalorder %s253, %s254
      %p263 = scmp.eq.s32.totalorder %s33, 0
      %p264 = por %p262, %p263
      %p265 = scmp.ne.s32.totalorder %s253, %s254
      %p266 = scmp.eq.s32.totalorder %s34, 1
      %p267 = por %p265, %p266
      %p269 = scmp.ne.s32.totalorder %s254, %s268
      %p270 = scmp.eq.s32.totalorder %s34, 0
      %p271 = por %p269, %p270
      %s272 = ssub.s32 %s28, %s35
      %p273 = scmp.eq.s32.totalorder %s272, 0
      %s275 = sadd.s32 %s274, 1
      %s276 = scalar_select %p273, %s274, %s275
      %p279 = pneg %p273
      %p280 = scmp.eq.s32.totalorder %s28, 1
      %p281 = por %p279, %p280
      %p282 = scmp.ne.s32.totalorder %s274, %s277
      %p283 = scmp.eq.s32.totalorder %s28, 0
      %p284 = por %p282, %p283
      %p285 = scmp.ne.s32.totalorder %s274, %s277
      %p286 = scmp.eq.s32.totalorder %s33, 1
      %p287 = por %p285, %p286
      %p288 = scmp.ne.s32.totalorder %s277, %s278
      %p289 = scmp.eq.s32.totalorder %s33, 0
      %p290 = por %p288, %p289
      %p291 = scmp.ne.s32.totalorder %s277, %s278
      %p292 = scmp.eq.s32.totalorder %s34, 1
      %p293 = por %p291, %p292
      %p295 = scmp.ne.s32.totalorder %s278, %s294
      %p296 = scmp.eq.s32.totalorder %s34, 0
      %p297 = por %p295, %p296
      %p298 = scmp.le.s32.totalorder 1, %s28
      %p299 = scmp.lt.s32.totalorder %s28, 3
      %p300 = pnand %p298, %p299
      %p301 = pneg %p300
      // Predicated region
      $region9: #{tpu_custom_call.1} parent=5 // pred_check
        _
      $region10: #{tpu_custom_call.1} parent=5 // pred_check_branch
        %303 = sbr.rel (%p300) target = $region12
      $region11: #{tpu_custom_call.1} parent=5 // pred_region
        %s304 = ssub.s32 %s28, 1
        // Predicated region
        $region13: #{tpu_custom_call.1} parent=11 // pred_check
          %p305 = pneg %p75
        $region14: #{tpu_custom_call.1} parent=11 // pred_check_branch
          %307 = sbr.rel (%p305) target = $region16
        $region15: #{tpu_custom_call.1} parent=11 // pred_region
          %s309 = ssub.s32 512, 512
          %310 = vsyncadd [#allocation6], %s309
          %s311 = sshll.u32 [#allocation5], 4
          %s312 = int_to_ptr.vmem [resolvable:$true] %s311
          %317 = dma.hbm_to_vmem [thread:$0]  %s1, 512, %s312, [#allocation6], 128, 128, 8
        $region16: #{tpu_custom_call.1} parent=11 // pred_fallthru
          _
        // Predicated region
        $region17: #{tpu_custom_call.1} parent=11 // pred_check
          %p318 = pneg %p96
        $region18: #{tpu_custom_call.1} parent=11 // pred_check_branch
          %320 = sbr.rel (%p318) target = $region20
        $region19: #{tpu_custom_call.1} parent=11 // pred_region
          %s322 = ssub.s32 512, 512
          %323 = vsyncadd [#allocation6], %s322
          %s324 = sshll.u32 [#allocation7], 4
          %s325 = int_to_ptr.vmem [resolvable:$true] %s324
          %330 = dma.hbm_to_vmem [thread:$0]  %s2, 512, %s325, [#allocation6], 128, 128, 8
        $region20: #{tpu_custom_call.1} parent=11 // pred_fallthru
          _
        // Predicated region
        $region21: #{tpu_custom_call.1} parent=11 // pred_check
          %p331 = pneg %p117
        $region22: #{tpu_custom_call.1} parent=11 // pred_check_branch
          %333 = sbr.rel (%p331) target = $region24
        $region23: #{tpu_custom_call.1} parent=11 // pred_region
          %s335 = ssub.s32 512, 512
          %336 = vsyncadd [#allocation9], %s335
          %s337 = sshll.u32 [#allocation8], 4
          %s338 = int_to_ptr.vmem [resolvable:$true] %s337
          %343 = dma.hbm_to_vmem [thread:$0]  %s3, 512, %s338, [#allocation9], 128, 128, 8
        $region24: #{tpu_custom_call.1} parent=11 // pred_fallthru
          _
        // Predicated region
        $region25: #{tpu_custom_call.1} parent=11 // pred_check
          %p344 = pneg %p138
        $region26: #{tpu_custom_call.1} parent=11 // pred_check_branch
          %346 = sbr.rel (%p344) target = $region28
        $region27: #{tpu_custom_call.1} parent=11 // pred_region
          %s348 = ssub.s32 512, 512
          %349 = vsyncadd [#allocation9], %s348
          %s350 = sshll.u32 [#allocation10], 4
          %s351 = int_to_ptr.vmem [resolvable:$true] %s350
          %356 = dma.hbm_to_vmem [thread:$0]  %s4, 512, %s351, [#allocation9], 128, 128, 8
        $region28: #{tpu_custom_call.1} parent=11 // pred_fallthru
          _
        // Predicated region
        $region29: #{tpu_custom_call.1} parent=11 // pred_check
          %p357 = pneg %p159
        $region30: #{tpu_custom_call.1} parent=11 // pred_check_branch
          %359 = sbr.rel (%p357) target = $region32
        $region31: #{tpu_custom_call.1} parent=11 // pred_region
          %s361 = ssub.s32 16, 16
          %362 = vsyncadd [#allocation12], %s361
          %s364 = sshll.u32 [#allocation11], 4
          %s365 = int_to_ptr.vmem [resolvable:$true] %s364
          %367 = dma.hbm_to_vmem [thread:$0]  %s5, 16, %s365, [#allocation12]
        $region32: #{tpu_custom_call.1} parent=11 // pred_fallthru
          _
        // Predicated region
        $region33: #{tpu_custom_call.1} parent=11 // pred_check
          %p368 = pneg %p180
        $region34: #{tpu_custom_call.1} parent=11 // pred_check_branch
          %370 = sbr.rel (%p368) target = $region36
        $region35: #{tpu_custom_call.1} parent=11 // pred_region
          %s372 = ssub.s32 16, 16
          %373 = vsyncadd [#allocation12], %s372
          %s375 = sshll.u32 [#allocation13], 4
          %s376 = int_to_ptr.vmem [resolvable:$true] %s375
          %378 = dma.hbm_to_vmem [thread:$0]  %s6, 16, %s376, [#allocation12]
        $region36: #{tpu_custom_call.1} parent=11 // pred_fallthru
          _
        // Predicated region
        $region37: #{tpu_custom_call.1} parent=11 // pred_check
          %p379 = pneg %p201
        $region38: #{tpu_custom_call.1} parent=11 // pred_check_branch
          %381 = sbr.rel (%p379) target = $region40
        $region39: #{tpu_custom_call.1} parent=11 // pred_region
          %s383 = ssub.s32 16, 16
          %384 = vsyncadd [#allocation15], %s383
          %s386 = sshll.u32 [#allocation14], 4
          %s387 = int_to_ptr.vmem [resolvable:$true] %s386
          %389 = dma.hbm_to_vmem [thread:$0]  %s7, 16, %s387, [#allocation15]
        $region40: #{tpu_custom_call.1} parent=11 // pred_fallthru
          _
        // Predicated region
        $region41: #{tpu_custom_call.1} parent=11 // pred_check
          %p390 = pneg %p222
        $region42: #{tpu_custom_call.1} parent=11 // pred_check_branch
          %392 = sbr.rel (%p390) target = $region44
        $region43: #{tpu_custom_call.1} parent=11 // pred_region
          %s394 = ssub.s32 16, 16
          %395 = vsyncadd [#allocation15], %s394
          %s397 = sshll.u32 [#allocation16], 4
          %s398 = int_to_ptr.vmem [resolvable:$true] %s397
          %400 = dma.hbm_to_vmem [thread:$0]  %s8, 16, %s398, [#allocation15]
        $region44: #{tpu_custom_call.1} parent=11 // pred_fallthru
          _
        // Predicated region
        $region45: #{tpu_custom_call.1} parent=11 // pred_check
          %p401 = pneg %p243
        $region46: #{tpu_custom_call.1} parent=11 // pred_check_branch
          %403 = sbr.rel (%p401) target = $region48
        $region47: #{tpu_custom_call.1} parent=11 // pred_region
          %s405 = ssub.s32 16, 16
          %406 = vsyncadd [#allocation18], %s405
          %s408 = sshll.u32 [#allocation17], 4
          %s409 = int_to_ptr.vmem [resolvable:$true] %s408
          %411 = dma.hbm_to_vmem [thread:$0]  %s9, 16, %s409, [#allocation18]
        $region48: #{tpu_custom_call.1} parent=11 // pred_fallthru
          _
        // Predicated region
        $region49: #{tpu_custom_call.1} parent=11 // pred_check
          %p412 = pneg %p264
        $region50: #{tpu_custom_call.1} parent=11 // pred_check_branch
          %414 = sbr.rel (%p412) target = $region52
        $region51: #{tpu_custom_call.1} parent=11 // pred_region
          %s416 = ssub.s32 16, 16
          %417 = vsyncadd [#allocation18], %s416
          %s419 = sshll.u32 [#allocation19], 4
          %s420 = int_to_ptr.vmem [resolvable:$true] %s419
          %422 = dma.hbm_to_vmem [thread:$0]  %s10, 16, %s420, [#allocation18]
        $region52: #{tpu_custom_call.1} parent=11 // pred_fallthru
          _
      $region12: #{tpu_custom_call.1} parent=5 // pred_fallthru
        _
      %p423 = scmp.lt.s32.totalorder %s28, 2
      // Predicated region
      $region53: #{tpu_custom_call.1} parent=5 // pred_check
        %p424 = pneg %p423
      $region54: #{tpu_custom_call.1} parent=5 // pred_check_branch
        %426 = sbr.rel (%p424) target = $region56
      $region55: #{tpu_custom_call.1} parent=5 // pred_region
        // Predicated region
        $region57: #{tpu_custom_call.1} parent=55 // pred_check
          %p427 = pneg %p48
        $region58: #{tpu_custom_call.1} parent=55 // pred_check_branch
          %429 = sbr.rel (%p427) target = $region60
        $region59: #{tpu_custom_call.1} parent=55 // pred_region
          %s430 = sand.u32 %s38, 1
          %s431 = scalar_lea.sflag [#allocation3], %s430
          %s432 = sand.u32 %s38, 1
          %s433 = smul.addr %s432, 16
          %s434 = scalar_lea.vmem [#allocation2], %s433
          %s436 = ssub.s32 256, 256
          %437 = vsyncadd %s431, %s436
          %s438 = smul.addr %s28, 2
          %s439 = smul.addr %s438, 128
          %s440 = scalar_lea.hbm %s0, %s439
          %s441 = sshll.u32 %s434, 4
          %s442 = int_to_ptr.vmem [resolvable:$true] %s441
          %447 = dma.hbm_to_vmem [thread:$0]  %s440, 256, %s442, %s431, 128, 128, 8
        $region60: #{tpu_custom_call.1} parent=55 // pred_fallthru
          _
      $region56: #{tpu_custom_call.1} parent=5 // pred_fallthru
        _
      %p448 = scmp.le.s32.totalorder 1, %s28
      %p449 = scmp.lt.s32.totalorder %s28, 3
      %p450 = pnand %p448, %p449
      %p451 = pneg %p450
      // Predicated region
      $region61: #{tpu_custom_call.1} parent=5 // pred_check
        _
      $region62: #{tpu_custom_call.1} parent=5 // pred_check_branch
        %453 = sbr.rel (%p450) target = $region64
      $region63: #{tpu_custom_call.1} parent=5 // pred_region
        %s454 = ssub.s32 %s28, 1
        %s455 = sand.u32 %s41, 1
        %s456 = scalar_lea.sflag [#allocation3], %s455
        %s457 = sand.u32 %s41, 1
        %s458 = smul.addr %s457, 16
        %s459 = scalar_lea.vmem [#allocation2], %s458
        // Predicated region
        $region65: #{tpu_custom_call.1} parent=63 // pred_check
          %p460 = pneg %p54
        $region66: #{tpu_custom_call.1} parent=63 // pred_check_branch
          %462 = sbr.rel (%p460) target = $region68
        $region67: #{tpu_custom_call.1} parent=63 // pred_region
          %463 = dma.done %s456, 256
        $region68: #{tpu_custom_call.1} parent=63 // pred_fallthru
          _
        // Predicated region
        $region69: #{tpu_custom_call.1} parent=63 // pred_check
          %p464 = pneg %p75
        $region70: #{tpu_custom_call.1} parent=63 // pred_check_branch
          %466 = sbr.rel (%p464) target = $region72
        $region71: #{tpu_custom_call.1} parent=63 // pred_region
          %467 = dma.done [#allocation6], 512
        $region72: #{tpu_custom_call.1} parent=63 // pred_fallthru
          _
        // Predicated region
        $region73: #{tpu_custom_call.1} parent=63 // pred_check
          %p468 = pneg %p96
        $region74: #{tpu_custom_call.1} parent=63 // pred_check_branch
          %470 = sbr.rel (%p468) target = $region76
        $region75: #{tpu_custom_call.1} parent=63 // pred_region
          %471 = dma.done [#allocation6], 512
        $region76: #{tpu_custom_call.1} parent=63 // pred_fallthru
          _
        // Predicated region
        $region77: #{tpu_custom_call.1} parent=63 // pred_check
          %p472 = pneg %p117
        $region78: #{tpu_custom_call.1} parent=63 // pred_check_branch
          %474 = sbr.rel (%p472) target = $region80
        $region79: #{tpu_custom_call.1} parent=63 // pred_region
          %475 = dma.done [#allocation9], 512
        $region80: #{tpu_custom_call.1} parent=63 // pred_fallthru
          _
        // Predicated region
        $region81: #{tpu_custom_call.1} parent=63 // pred_check
          %p476 = pneg %p138
        $region82: #{tpu_custom_call.1} parent=63 // pred_check_branch
          %478 = sbr.rel (%p476) target = $region84
        $region83: #{tpu_custom_call.1} parent=63 // pred_region
          %479 = dma.done [#allocation9], 512
        $region84: #{tpu_custom_call.1} parent=63 // pred_fallthru
          _
        // Predicated region
        $region85: #{tpu_custom_call.1} parent=63 // pred_check
          %p480 = pneg %p159
        $region86: #{tpu_custom_call.1} parent=63 // pred_check_branch
          %482 = sbr.rel (%p480) target = $region88
        $region87: #{tpu_custom_call.1} parent=63 // pred_region
          %483 = dma.done [#allocation12], 16
        $region88: #{tpu_custom_call.1} parent=63 // pred_fallthru
          _
        // Predicated region
        $region89: #{tpu_custom_call.1} parent=63 // pred_check
          %p484 = pneg %p180
        $region90: #{tpu_custom_call.1} parent=63 // pred_check_branch
          %486 = sbr.rel (%p484) target = $region92
        $region91: #{tpu_custom_call.1} parent=63 // pred_region
          %487 = dma.done [#allocation12], 16
        $region92: #{tpu_custom_call.1} parent=63 // pred_fallthru
          _
        // Predicated region
        $region93: #{tpu_custom_call.1} parent=63 // pred_check
          %p488 = pneg %p201
        $region94: #{tpu_custom_call.1} parent=63 // pred_check_branch
          %490 = sbr.rel (%p488) target = $region96
        $region95: #{tpu_custom_call.1} parent=63 // pred_region
          %491 = dma.done [#allocation15], 16
        $region96: #{tpu_custom_call.1} parent=63 // pred_fallthru
          _
        // Predicated region
        $region97: #{tpu_custom_call.1} parent=63 // pred_check
          %p492 = pneg %p222
        $region98: #{tpu_custom_call.1} parent=63 // pred_check_branch
          %494 = sbr.rel (%p492) target = $region100
        $region99: #{tpu_custom_call.1} parent=63 // pred_region
          %495 = dma.done [#allocation15], 16
        $region100: #{tpu_custom_call.1} parent=63 // pred_fallthru
          _
        // Predicated region
        $region101: #{tpu_custom_call.1} parent=63 // pred_check
          %p496 = pneg %p243
        $region102: #{tpu_custom_call.1} parent=63 // pred_check_branch
          %498 = sbr.rel (%p496) target = $region104
        $region103: #{tpu_custom_call.1} parent=63 // pred_region
          %499 = dma.done [#allocation18], 16
        $region104: #{tpu_custom_call.1} parent=63 // pred_fallthru
          _
        // Predicated region
        $region105: #{tpu_custom_call.1} parent=63 // pred_check
          %p500 = pneg %p264
        $region106: #{tpu_custom_call.1} parent=63 // pred_check_branch
          %502 = sbr.rel (%p500) target = $region108
        $region107: #{tpu_custom_call.1} parent=63 // pred_region
          %503 = dma.done [#allocation18], 16
        $region108: #{tpu_custom_call.1} parent=63 // pred_fallthru
          _
        %s504 = sand.u32 %s41, 1
        %s505 = scalar_lea.sflag [#allocation3], %s504
        %s506 = sand.u32 %s41, 1
        %s507 = smul.addr %s506, 16
        %s508 = scalar_lea.vmem [#allocation2], %s507
        %p509 = pneg %p54
        %p510 = pneg %p51
        %p511 = pneg %p75
        %p512 = pneg %p72
        %p513 = pneg %p96
        %p514 = pneg %p93
        %p515 = pneg %p117
        %p516 = pneg %p114
        %p517 = pneg %p138
        %p518 = pneg %p135
        %p519 = pneg %p159
        %p520 = pneg %p156
        %p521 = pneg %p180
        %p522 = pneg %p177
        %p523 = pneg %p201
        %p524 = pneg %p198
        %p525 = pneg %p222
        %p526 = pneg %p219
        %p527 = pneg %p243
        %p528 = pneg %p240
        %p529 = pneg %p264
        %p530 = pneg %p261
        %p531 = pneg %p290
        %p532 = pneg %p287
        %s533 = sand.u32 %s277, 1
        %s534 = scalar_lea.sflag [#allocation4], %s533
        %s535 = sand.u32 %s277, 1
        %s536 = smul.addr %s535, 16
        %s537 = scalar_lea.vmem [#allocation20], %s536
        %v538 = vld [vmem:[%s459] sm:$0xff]
        %v539 = vld [vmem:[%s459 + $0x8] sm:$0xff]
        %v540 = vld [vmem:[#allocation5] sm:$0xff]
        %v541 = vld [vmem:[#allocation5 + $0x8] sm:$0xff]
        %v542 = vld [vmem:[#allocation5 + $0x10] sm:$0xff]
        %v543 = vld [vmem:[#allocation5 + $0x18] sm:$0xff]
        %v544 = vld [vmem:[#allocation11] sm:$0x1]
        %v546 = vlaneseq
        %v547 = vshrl.u32 %v546, 7
        %v548 = vsub.s32 0, %v547
        %v549 = vrot.slane %v544, %v548
        %vm551 = vcmask 261120
        %v553 = vsel %vm551, %v538, 0
        %v556 = vsel %vm551, %v539, 0
        %558 = vmatprep.subr.mxu0 0.0
        %559 = vmatpush1.msra.mxu0 %v540
        %560 = vmatprep.subr.mxu0 0.0
        %561 = vmatpush1.msra.mxu0 %v541
        %562 = vmatprep.subr.mxu0 0.0
        %563 = vmatpush1.msra.mxu0 %v542
        %564 = vmatprep.subr.mxu0 0.0
        %565 = vmatpush1.msra.mxu0 %v543
        %566 = vmatprep.subr.mxu0 0.0
        %567 = vmatpush1.msra.mxu0 0.0
        %568 = vmatprep.subr.mxu0 0.0
        %569 = vmatpush1.msra.mxu0 0.0
        %570 = vmatprep.subr.mxu0 0.0
        %571 = vmatpush1.msra.mxu0 0.0
        %572 = vmatprep.subr.mxu0 0.0
        %573 = vmatpush1.msra.mxu0 0.0
        %574 = vmatprep.subr.mxu0 0.0
        %575 = vmatpush1.msra.mxu0 0.0
        %576 = vmatprep.subr.mxu0 0.0
        %577 = vmatpush1.msra.mxu0 0.0
        %578 = vmatprep.subr.mxu0 0.0
        %579 = vmatpush1.msra.mxu0 0.0
        %580 = vmatprep.subr.mxu0 0.0
        %581 = vmatpush1.msra.mxu0 0.0
        %582 = vmatprep.subr.mxu0 0.0
        %583 = vmatpush1.msra.mxu0 0.0
        %584 = vmatprep.subr.mxu0 0.0
        %585 = vmatpush1.msra.mxu0 0.0
        %586 = vmatprep.subr.mxu0 0.0
        %587 = vmatpush1.msra.mxu0 0.0
        %588 = vmatprep.subr.mxu0 0.0
        %589 = vmatpush1.msra.mxu0 0.0
        %590 = vmatprep.subr.mxu0 0.0
        %591 = vmatpush1.msra.mxu0 0.0
        %592 = vmatprep.subr.mxu0 0.0
        %593 = vmatpush1.msra.mxu0 0.0
        %594 = vmatprep.subr.mxu0 0.0
        %595 = vmatpush1.msra.mxu0 0.0
        %596 = vmatprep.subr.mxu0 0.0
        %597 = vmatpush1.msra.mxu0 0.0
        %598 = vmatprep.subr.mxu0 0.0
        %599 = vmatpush1.msra.mxu0 0.0
        %600 = vmatprep.subr.mxu0 0.0
        %601 = vmatpush1.msra.mxu0 0.0
        %602 = vmatprep.subr.mxu0 0.0
        %603 = vmatpush1.msra.mxu0 0.0
        %604 = vmatprep.subr.mxu0 0.0
        %605 = vmatpush1.msra.mxu0 0.0
        %606 = vmatprep.subr.mxu0 0.0
        %607 = vmatpush1.msra.mxu0 0.0
        %608 = vmatprep.subr.mxu0 0.0
        %609 = vmatpush1.msra.mxu0 0.0
        %610 = vmatprep.subr.mxu0 0.0
        %611 = vmatpush1.msra.mxu0 0.0
        %612 = vmatprep.subr.mxu0 0.0
        %613 = vmatpush1.msra.mxu0 0.0
        %614 = vmatprep.subr.mxu0 0.0
        %615 = vmatpush1.msra.mxu0 0.0
        %616 = vmatprep.subr.mxu0 0.0
        %617 = vmatpush1.msra.mxu0 0.0
        %618 = vmatprep.subr.mxu0 0.0
        %619 = vmatpush1.msra.mxu0 0.0
        %620 = vmatprep.subr.mxu0 0.0
        %621 = vmatpush1.msra.mxu0 0.0
        %622 = vmatprep.mubr.f32.mxu0 0.0
        %623 = vmatmul.mubr.f32.gmra.mrb[0].mxu0 %v553
        %v624 = vpop.f32.mrb[0].mxu0
        %v625 = vadd.f32 %v549, %v624
        %v626 = vpop.f32.mrb[0].mxu0
        %627 = vmatprep.mubr.f32.mxu0 0.0
        %628 = vmatmul.mubr.f32.gmra.mrb[0].mxu0 %v556
        %v629 = vpop.f32.mrb[0].mxu0
        %v630 = vadd.f32 %v549, %v629
        %v631 = vpop.f32.mrb[0].mxu0
        %632 = vdwg.mxu0
        %v633 = vld [vmem:[#allocation7] sm:$0xff]
        %v634 = vld [vmem:[#allocation7 + $0x8] sm:$0xff]
        %v635 = vld [vmem:[#allocation7 + $0x10] sm:$0xff]
        %v636 = vld [vmem:[#allocation7 + $0x18] sm:$0xff]
        %v637 = vld [vmem:[#allocation13] sm:$0x1]
        %v639 = vlaneseq
        %v640 = vshrl.u32 %v639, 7
        %v641 = vsub.s32 0, %v640
        %v642 = vrot.slane %v637, %v641
        %644 = vmatprep.subr.mxu0 0.0
        %645 = vmatpush1.msra.mxu0 %v633
        %646 = vmatprep.subr.mxu0 0.0
        %647 = vmatpush1.msra.mxu0 %v634
        %648 = vmatprep.subr.mxu0 0.0
        %649 = vmatpush1.msra.mxu0 %v635
        %650 = vmatprep.subr.mxu0 0.0
        %651 = vmatpush1.msra.mxu0 %v636
        %652 = vmatprep.subr.mxu0 0.0
        %653 = vmatpush1.msra.mxu0 0.0
        %654 = vmatprep.subr.mxu0 0.0
        %655 = vmatpush1.msra.mxu0 0.0
        %656 = vmatprep.subr.mxu0 0.0
        %657 = vmatpush1.msra.mxu0 0.0
        %658 = vmatprep.subr.mxu0 0.0
        %659 = vmatpush1.msra.mxu0 0.0
        %660 = vmatprep.subr.mxu0 0.0
        %661 = vmatpush1.msra.mxu0 0.0
        %662 = vmatprep.subr.mxu0 0.0
        %663 = vmatpush1.msra.mxu0 0.0
        %664 = vmatprep.subr.mxu0 0.0
        %665 = vmatpush1.msra.mxu0 0.0
        %666 = vmatprep.subr.mxu0 0.0
        %667 = vmatpush1.msra.mxu0 0.0
        %668 = vmatprep.subr.mxu0 0.0
        %669 = vmatpush1.msra.mxu0 0.0
        %670 = vmatprep.subr.mxu0 0.0
        %671 = vmatpush1.msra.mxu0 0.0
        %672 = vmatprep.subr.mxu0 0.0
        %673 = vmatpush1.msra.mxu0 0.0
        %674 = vmatprep.subr.mxu0 0.0
        %675 = vmatpush1.msra.mxu0 0.0
        %676 = vmatprep.subr.mxu0 0.0
        %677 = vmatpush1.msra.mxu0 0.0
        %678 = vmatprep.subr.mxu0 0.0
        %679 = vmatpush1.msra.mxu0 0.0
        %680 = vmatprep.subr.mxu0 0.0
        %681 = vmatpush1.msra.mxu0 0.0
        %682 = vmatprep.subr.mxu0 0.0
        %683 = vmatpush1.msra.mxu0 0.0
        %684 = vmatprep.subr.mxu0 0.0
        %685 = vmatpush1.msra.mxu0 0.0
        %686 = vmatprep.subr.mxu0 0.0
        %687 = vmatpush1.msra.mxu0 0.0
        %688 = vmatprep.subr.mxu0 0.0
        %689 = vmatpush1.msra.mxu0 0.0
        %690 = vmatprep.subr.mxu0 0.0
        %691 = vmatpush1.msra.mxu0 0.0
        %692 = vmatprep.subr.mxu0 0.0
        %693 = vmatpush1.msra.mxu0 0.0
        %694 = vmatprep.subr.mxu0 0.0
        %695 = vmatpush1.msra.mxu0 0.0
        %696 = vmatprep.subr.mxu0 0.0
        %697 = vmatpush1.msra.mxu0 0.0
        %698 = vmatprep.subr.mxu0 0.0
        %699 = vmatpush1.msra.mxu0 0.0
        %700 = vmatprep.subr.mxu0 0.0
        %701 = vmatpush1.msra.mxu0 0.0
        %702 = vmatprep.subr.mxu0 0.0
        %703 = vmatpush1.msra.mxu0 0.0
        %704 = vmatprep.subr.mxu0 0.0
        %705 = vmatpush1.msra.mxu0 0.0
        %706 = vmatprep.subr.mxu0 0.0
        %707 = vmatpush1.msra.mxu0 0.0
        %708 = vmatprep.mubr.f32.mxu0 0.0
        %709 = vmatmul.mubr.f32.gmra.mrb[0].mxu0 %v553
        %v710 = vpop.f32.mrb[0].mxu0
        %v711 = vadd.f32 %v642, %v710
        %v712 = vpop.f32.mrb[0].mxu0
        %713 = vmatprep.mubr.f32.mxu0 0.0
        %714 = vmatmul.mubr.f32.gmra.mrb[0].mxu0 %v556
        %v715 = vpop.f32.mrb[0].mxu0
        %v716 = vadd.f32 %v642, %v715
        %v717 = vpop.f32.mrb[0].mxu0
        %718 = vdwg.mxu0
        %v719 = vld [vmem:[#allocation8] sm:$0xff]
        %v720 = vld [vmem:[#allocation8 + $0x8] sm:$0xff]
        %v721 = vld [vmem:[#allocation8 + $0x10] sm:$0xff]
        %v722 = vld [vmem:[#allocation8 + $0x18] sm:$0xff]
        %v723 = vld [vmem:[#allocation14] sm:$0x1]
        %v725 = vlaneseq
        %v726 = vshrl.u32 %v725, 7
        %v727 = vsub.s32 0, %v726
        %v728 = vrot.slane %v723, %v727
        %730 = vmatprep.subr.mxu0 0.0
        %731 = vmatpush1.msra.mxu0 %v719
        %732 = vmatprep.subr.mxu0 0.0
        %733 = vmatpush1.msra.mxu0 %v720
        %734 = vmatprep.subr.mxu0 0.0
        %735 = vmatpush1.msra.mxu0 %v721
        %736 = vmatprep.subr.mxu0 0.0
        %737 = vmatpush1.msra.mxu0 %v722
        %738 = vmatprep.subr.mxu0 0.0
        %739 = vmatpush1.msra.mxu0 0.0
        %740 = vmatprep.subr.mxu0 0.0
        %741 = vmatpush1.msra.mxu0 0.0
        %742 = vmatprep.subr.mxu0 0.0
        %743 = vmatpush1.msra.mxu0 0.0
        %744 = vmatprep.subr.mxu0 0.0
        %745 = vmatpush1.msra.mxu0 0.0
        %746 = vmatprep.subr.mxu0 0.0
        %747 = vmatpush1.msra.mxu0 0.0
        %748 = vmatprep.subr.mxu0 0.0
        %749 = vmatpush1.msra.mxu0 0.0
        %750 = vmatprep.subr.mxu0 0.0
        %751 = vmatpush1.msra.mxu0 0.0
        %752 = vmatprep.subr.mxu0 0.0
        %753 = vmatpush1.msra.mxu0 0.0
        %754 = vmatprep.subr.mxu0 0.0
        %755 = vmatpush1.msra.mxu0 0.0
        %756 = vmatprep.subr.mxu0 0.0
        %757 = vmatpush1.msra.mxu0 0.0
        %758 = vmatprep.subr.mxu0 0.0
        %759 = vmatpush1.msra.mxu0 0.0
        %760 = vmatprep.subr.mxu0 0.0
        %761 = vmatpush1.msra.mxu0 0.0
        %762 = vmatprep.subr.mxu0 0.0
        %763 = vmatpush1.msra.mxu0 0.0
        %764 = vmatprep.subr.mxu0 0.0
        %765 = vmatpush1.msra.mxu0 0.0
        %766 = vmatprep.subr.mxu0 0.0
        %767 = vmatpush1.msra.mxu0 0.0
        %768 = vmatprep.subr.mxu0 0.0
        %769 = vmatpush1.msra.mxu0 0.0
        %770 = vmatprep.subr.mxu0 0.0
        %771 = vmatpush1.msra.mxu0 0.0
        %772 = vmatprep.subr.mxu0 0.0
        %773 = vmatpush1.msra.mxu0 0.0
        %774 = vmatprep.subr.mxu0 0.0
        %775 = vmatpush1.msra.mxu0 0.0
        %776 = vmatprep.subr.mxu0 0.0
        %777 = vmatpush1.msra.mxu0 0.0
        %778 = vmatprep.subr.mxu0 0.0
        %779 = vmatpush1.msra.mxu0 0.0
        %780 = vmatprep.subr.mxu0 0.0
        %781 = vmatpush1.msra.mxu0 0.0
        %782 = vmatprep.subr.mxu0 0.0
        %783 = vmatpush1.msra.mxu0 0.0
        %784 = vmatprep.subr.mxu0 0.0
        %785 = vmatpush1.msra.mxu0 0.0
        %786 = vmatprep.subr.mxu0 0.0
        %787 = vmatpush1.msra.mxu0 0.0
        %788 = vmatprep.subr.mxu0 0.0
        %789 = vmatpush1.msra.mxu0 0.0
        %790 = vmatprep.subr.mxu0 0.0
        %791 = vmatpush1.msra.mxu0 0.0
        %792 = vmatprep.subr.mxu0 0.0
        %793 = vmatpush1.msra.mxu0 0.0
        %794 = vmatprep.mubr.f32.mxu0 0.0
        %795 = vmatmul.mubr.f32.gmra.mrb[0].mxu0 %v553
        %v796 = vpop.f32.mrb[0].mxu0
        %v797 = vadd.f32 %v728, %v796
        %v798 = vpop.f32.mrb[0].mxu0
        %799 = vmatprep.mubr.f32.mxu0 0.0
        %800 = vmatmul.mubr.f32.gmra.mrb[0].mxu0 %v556
        %v801 = vpop.f32.mrb[0].mxu0
        %v802 = vadd.f32 %v728, %v801
        %v803 = vpop.f32.mrb[0].mxu0
        %804 = vdwg.mxu0
        %v805 = vmul.f32 %v625, 0.35355338
        %v806 = vmul.f32 %v630, 0.35355338
        %vm807 = vcmask 64512
        %v809 = vsel %vm807, %v805, 0
        %v812 = vsel %vm807, %v806, 0
        %v815 = vsel %vm807, %v711, 0
        %v818 = vsel %vm807, %v716, 0
        %820 = vmatprep.subr.mxu0 0.0
        %821 = vmatpush1.xpose.msra.mxu0 %v815
        %822 = vmatprep.subr.mxu0 0.0
        %823 = vmatpush1.xpose.msra.mxu0 %v818
        %824 = vmatprep.subr.mxu0 0.0
        %825 = vmatpush1.xpose.msra.mxu0 0.0
        %826 = vmatprep.subr.mxu0 0.0
        %827 = vmatpush1.xpose.msra.mxu0 0.0
        %828 = vmatprep.subr.mxu0 0.0
        %829 = vmatpush1.xpose.msra.mxu0 0.0
        %830 = vmatprep.subr.mxu0 0.0
        %831 = vmatpush1.xpose.msra.mxu0 0.0
        %832 = vmatprep.subr.mxu0 0.0
        %833 = vmatpush1.xpose.msra.mxu0 0.0
        %834 = vmatprep.subr.mxu0 0.0
        %835 = vmatpush1.xpose.msra.mxu0 0.0
        %836 = vmatprep.subr.mxu0 0.0
        %837 = vmatpush1.xpose.msra.mxu0 0.0
        %838 = vmatprep.subr.mxu0 0.0
        %839 = vmatpush1.xpose.msra.mxu0 0.0
        %840 = vmatprep.subr.mxu0 0.0
        %841 = vmatpush1.xpose.msra.mxu0 0.0
        %842 = vmatprep.subr.mxu0 0.0
        %843 = vmatpush1.xpose.msra.mxu0 0.0
        %844 = vmatprep.subr.mxu0 0.0
        %845 = vmatpush1.xpose.msra.mxu0 0.0
        %846 = vmatprep.subr.mxu0 0.0
        %847 = vmatpush1.xpose.msra.mxu0 0.0
        %848 = vmatprep.subr.mxu0 0.0
        %849 = vmatpush1.xpose.msra.mxu0 0.0
        %850 = vmatprep.subr.mxu0 0.0
        %851 = vmatpush1.xpose.msra.mxu0 0.0
        %852 = vmatprep.subr.mxu0 0.0
        %853 = vmatpush1.xpose.msra.mxu0 0.0
        %854 = vmatprep.subr.mxu0 0.0
        %855 = vmatpush1.xpose.msra.mxu0 0.0
        %856 = vmatprep.subr.mxu0 0.0
        %857 = vmatpush1.xpose.msra.mxu0 0.0
        %858 = vmatprep.subr.mxu0 0.0
        %859 = vmatpush1.xpose.msra.mxu0 0.0
        %860 = vmatprep.subr.mxu0 0.0
        %861 = vmatpush1.xpose.msra.mxu0 0.0
        %862 = vmatprep.subr.mxu0 0.0
        %863 = vmatpush1.xpose.msra.mxu0 0.0
        %864 = vmatprep.subr.mxu0 0.0
        %865 = vmatpush1.xpose.msra.mxu0 0.0
        %866 = vmatprep.subr.mxu0 0.0
        %867 = vmatpush1.xpose.msra.mxu0 0.0
        %868 = vmatprep.subr.mxu0 0.0
        %869 = vmatpush1.xpose.msra.mxu0 0.0
        %870 = vmatprep.subr.mxu0 0.0
        %871 = vmatpush1.xpose.msra.mxu0 0.0
        %872 = vmatprep.subr.mxu0 0.0
        %873 = vmatpush1.xpose.msra.mxu0 0.0
        %874 = vmatprep.subr.mxu0 0.0
        %875 = vmatpush1.xpose.msra.mxu0 0.0
        %876 = vmatprep.subr.mxu0 0.0
        %877 = vmatpush1.xpose.msra.mxu0 0.0
        %878 = vmatprep.subr.mxu0 0.0
        %879 = vmatpush1.xpose.msra.mxu0 0.0
        %880 = vmatprep.subr.mxu0 0.0
        %881 = vmatpush1.xpose.msra.mxu0 0.0
        %882 = vmatprep.subr.mxu0 0.0
        %883 = vmatpush1.xpose.msra.mxu0 0.0
        %884 = vmatprep.mubr.f32.mxu0 0.0
        %885 = vmatmul.mubr.f32.gmra.mrb[0].mxu0 %v809
        %v886 = vpop.f32.mrb[0].mxu0
        %v887 = vadd.f32 0.0, %v886
        %v888 = vpop.f32.mrb[0].mxu0
        %889 = vmatprep.mubr.f32.mxu0 0.0
        %890 = vmatmul.mubr.f32.gmra.mrb[0].mxu0 %v812
        %v891 = vpop.f32.mrb[0].mxu0
        %v892 = vadd.f32 0.0, %v891
        %v893 = vpop.f32.mrb[0].mxu0
        %894 = vdwg.mxu0
        %vm895 = vcmask 130048
        %v896 = vsel %vm895, %v887, -inf
        %897 = vmax.xlane.f32.xlu0 %v896
        %v898 = vpop.xlane.xlu0 %897
        %v899 = vsel %vm895, %v892, -inf
        %900 = vmax.xlane.f32.xlu0 %v899
        %v901 = vpop.xlane.xlu0 %900
        %v902 = vsub.f32 %v887, %v898
        %v903 = vsub.f32 %v892, %v901
        %v904 = vmul.f32 %v902, 1.442695
        %v905 = vpow.pop %v904
        %v906 = vmul.f32 %v903, 1.442695
        %v907 = vpow.pop %v906
        %v908 = vsel %vm895, %v905, 0.0
        %909 = vadd.xlane.f32.xlu0 %v908
        %v910 = vpop.xlane.xlu0 %909
        %v911 = vsel %vm895, %v907, 0.0
        %912 = vadd.xlane.f32.xlu0 %v911
        %v913 = vpop.xlane.xlu0 %912
        %v914 = vrcp.pop %v910
        %v915 = vrcp.pop %v913
        %v916 = vmul.f32 %v905, %v914
        %v917 = vmul.f32 %v907, %v915
        %v919 = vsel %vm895, %v916, 0
        %v922 = vsel %vm895, %v917, 0
        %924 = vmatprep.subr.mxu0 0.0
        %925 = vmatpush1.msra.mxu0 %v797
        %926 = vmatprep.subr.mxu0 0.0
        %927 = vmatpush1.msra.mxu0 %v802
        %928 = vmatprep.subr.mxu0 0.0
        %929 = vmatpush1.msra.mxu0 0.0
        %930 = vmatprep.subr.mxu0 0.0
        %931 = vmatpush1.msra.mxu0 0.0
        %932 = vmatprep.subr.mxu0 0.0
        %933 = vmatpush1.msra.mxu0 0.0
        %934 = vmatprep.subr.mxu0 0.0
        %935 = vmatpush1.msra.mxu0 0.0
        %936 = vmatprep.subr.mxu0 0.0
        %937 = vmatpush1.msra.mxu0 0.0
        %938 = vmatprep.subr.mxu0 0.0
        %939 = vmatpush1.msra.mxu0 0.0
        %940 = vmatprep.subr.mxu0 0.0
        %941 = vmatpush1.msra.mxu0 0.0
        %942 = vmatprep.subr.mxu0 0.0
        %943 = vmatpush1.msra.mxu0 0.0
        %944 = vmatprep.subr.mxu0 0.0
        %945 = vmatpush1.msra.mxu0 0.0
        %946 = vmatprep.subr.mxu0 0.0
        %947 = vmatpush1.msra.mxu0 0.0
        %948 = vmatprep.subr.mxu0 0.0
        %949 = vmatpush1.msra.mxu0 0.0
        %950 = vmatprep.subr.mxu0 0.0
        %951 = vmatpush1.msra.mxu0 0.0
        %952 = vmatprep.subr.mxu0 0.0
        %953 = vmatpush1.msra.mxu0 0.0
        %954 = vmatprep.subr.mxu0 0.0
        %955 = vmatpush1.msra.mxu0 0.0
        %956 = vmatprep.subr.mxu0 0.0
        %957 = vmatpush1.msra.mxu0 0.0
        %958 = vmatprep.subr.mxu0 0.0
        %959 = vmatpush1.msra.mxu0 0.0
        %960 = vmatprep.subr.mxu0 0.0
        %961 = vmatpush1.msra.mxu0 0.0
        %962 = vmatprep.subr.mxu0 0.0
        %963 = vmatpush1.msra.mxu0 0.0
        %964 = vmatprep.subr.mxu0 0.0
        %965 = vmatpush1.msra.mxu0 0.0
        %966 = vmatprep.subr.mxu0 0.0
        %967 = vmatpush1.msra.mxu0 0.0
        %968 = vmatprep.subr.mxu0 0.0
        %969 = vmatpush1.msra.mxu0 0.0
        %970 = vmatprep.subr.mxu0 0.0
        %971 = vmatpush1.msra.mxu0 0.0
        %972 = vmatprep.subr.mxu0 0.0
        %973 = vmatpush1.msra.mxu0 0.0
        %974 = vmatprep.subr.mxu0 0.0
        %975 = vmatpush1.msra.mxu0 0.0
        %976 = vmatprep.subr.mxu0 0.0
        %977 = vmatpush1.msra.mxu0 0.0
        %978 = vmatprep.subr.mxu0 0.0
        %979 = vmatpush1.msra.mxu0 0.0
        %980 = vmatprep.subr.mxu0 0.0
        %981 = vmatpush1.msra.mxu0 0.0
        %982 = vmatprep.subr.mxu0 0.0
        %983 = vmatpush1.msra.mxu0 0.0
        %984 = vmatprep.subr.mxu0 0.0
        %985 = vmatpush1.msra.mxu0 0.0
        %986 = vmatprep.subr.mxu0 0.0
        %987 = vmatpush1.msra.mxu0 0.0
        %988 = vmatprep.mubr.f32.mxu0 0.0
        %989 = vmatmul.mubr.f32.gmra.mrb[0].mxu0 %v919
        %v990 = vpop.f32.mrb[0].mxu0
        %v991 = vadd.f32 0.0, %v990
        %v992 = vpop.f32.mrb[0].mxu0
        %993 = vmatprep.mubr.f32.mxu0 0.0
        %994 = vmatmul.mubr.f32.gmra.mrb[0].mxu0 %v922
        %v995 = vpop.f32.mrb[0].mxu0
        %v996 = vadd.f32 0.0, %v995
        %v997 = vpop.f32.mrb[0].mxu0
        %998 = vdwg.mxu0
        %999 = vrot.lane.b32.xlu0 %v805, 120
        %v1000 = vpop.permute.xlu0 %999
        %1001 = vrot.lane.b32.xlu0 %v806, 120
        %v1002 = vpop.permute.xlu0 %1001
        %1003 = vrot.lane.b32.xlu0 %v711, 120
        %v1004 = vpop.permute.xlu0 %1003
        %1005 = vrot.lane.b32.xlu0 %v716, 120
        %v1006 = vpop.permute.xlu0 %1005
        %v1007 = vsel %vm807, %v1000, 0
        %v1009 = vsel %vm807, %v1002, 0
        %v1011 = vsel %vm807, %v1004, 0
        %v1013 = vsel %vm807, %v1006, 0
        %1015 = vmatprep.subr.mxu0 0.0
        %1016 = vmatpush1.xpose.msra.mxu0 %v1011
        %1017 = vmatprep.subr.mxu0 0.0
        %1018 = vmatpush1.xpose.msra.mxu0 %v1013
        %1019 = vmatprep.subr.mxu0 0.0
        %1020 = vmatpush1.xpose.msra.mxu0 0.0
        %1021 = vmatprep.subr.mxu0 0.0
        %1022 = vmatpush1.xpose.msra.mxu0 0.0
        %1023 = vmatprep.subr.mxu0 0.0
        %1024 = vmatpush1.xpose.msra.mxu0 0.0
        %1025 = vmatprep.subr.mxu0 0.0
        %1026 = vmatpush1.xpose.msra.mxu0 0.0
        %1027 = vmatprep.subr.mxu0 0.0
        %1028 = vmatpush1.xpose.msra.mxu0 0.0
        %1029 = vmatprep.subr.mxu0 0.0
        %1030 = vmatpush1.xpose.msra.mxu0 0.0
        %1031 = vmatprep.subr.mxu0 0.0
        %1032 = vmatpush1.xpose.msra.mxu0 0.0
        %1033 = vmatprep.subr.mxu0 0.0
        %1034 = vmatpush1.xpose.msra.mxu0 0.0
        %1035 = vmatprep.subr.mxu0 0.0
        %1036 = vmatpush1.xpose.msra.mxu0 0.0
        %1037 = vmatprep.subr.mxu0 0.0
        %1038 = vmatpush1.xpose.msra.mxu0 0.0
        %1039 = vmatprep.subr.mxu0 0.0
        %1040 = vmatpush1.xpose.msra.mxu0 0.0
        %1041 = vmatprep.subr.mxu0 0.0
        %1042 = vmatpush1.xpose.msra.mxu0 0.0
        %1043 = vmatprep.subr.mxu0 0.0
        %1044 = vmatpush1.xpose.msra.mxu0 0.0
        %1045 = vmatprep.subr.mxu0 0.0
        %1046 = vmatpush1.xpose.msra.mxu0 0.0
        %1047 = vmatprep.subr.mxu0 0.0
        %1048 = vmatpush1.xpose.msra.mxu0 0.0
        %1049 = vmatprep.subr.mxu0 0.0
        %1050 = vmatpush1.xpose.msra.mxu0 0.0
        %1051 = vmatprep.subr.mxu0 0.0
        %1052 = vmatpush1.xpose.msra.mxu0 0.0
        %1053 = vmatprep.subr.mxu0 0.0
        %1054 = vmatpush1.xpose.msra.mxu0 0.0
        %1055 = vmatprep.subr.mxu0 0.0
        %1056 = vmatpush1.xpose.msra.mxu0 0.0
        %1057 = vmatprep.subr.mxu0 0.0
        %1058 = vmatpush1.xpose.msra.mxu0 0.0
        %1059 = vmatprep.subr.mxu0 0.0
        %1060 = vmatpush1.xpose.msra.mxu0 0.0
        %1061 = vmatprep.subr.mxu0 0.0
        %1062 = vmatpush1.xpose.msra.mxu0 0.0
        %1063 = vmatprep.subr.mxu0 0.0
        %1064 = vmatpush1.xpose.msra.mxu0 0.0
        %1065 = vmatprep.subr.mxu0 0.0
        %1066 = vmatpush1.xpose.msra.mxu0 0.0
        %1067 = vmatprep.subr.mxu0 0.0
        %1068 = vmatpush1.xpose.msra.mxu0 0.0
        %1069 = vmatprep.subr.mxu0 0.0
        %1070 = vmatpush1.xpose.msra.mxu0 0.0
        %1071 = vmatprep.subr.mxu0 0.0
        %1072 = vmatpush1.xpose.msra.mxu0 0.0
        %1073 = vmatprep.subr.mxu0 0.0
        %1074 = vmatpush1.xpose.msra.mxu0 0.0
        %1075 = vmatprep.subr.mxu0 0.0
        %1076 = vmatpush1.xpose.msra.mxu0 0.0
        %1077 = vmatprep.subr.mxu0 0.0
        %1078 = vmatpush1.xpose.msra.mxu0 0.0
        %1079 = vmatprep.mubr.f32.mxu0 0.0
        %1080 = vmatmul.mubr.f32.gmra.mrb[0].mxu0 %v1007
        %v1081 = vpop.f32.mrb[0].mxu0
        %v1082 = vadd.f32 0.0, %v1081
        %v1083 = vpop.f32.mrb[0].mxu0
        %1084 = vmatprep.mubr.f32.mxu0 0.0
        %1085 = vmatmul.mubr.f32.gmra.mrb[0].mxu0 %v1009
        %v1086 = vpop.f32.mrb[0].mxu0
        %v1087 = vadd.f32 0.0, %v1086
        %v1088 = vpop.f32.mrb[0].mxu0
        %1089 = vdwg.mxu0
        %v1090 = vsel %vm895, %v1082, -inf
        %1091 = vmax.xlane.f32.xlu0 %v1090
        %v1092 = vpop.xlane.xlu0 %1091
        %v1093 = vsel %vm895, %v1087, -inf
        %1094 = vmax.xlane.f32.xlu0 %v1093
        %v1095 = vpop.xlane.xlu0 %1094
        %v1096 = vsub.f32 %v1082, %v1092
        %v1097 = vsub.f32 %v1087, %v1095
        %v1098 = vmul.f32 %v1096, 1.442695
        %v1099 = vpow.pop %v1098
        %v1100 = vmul.f32 %v1097, 1.442695
        %v1101 = vpow.pop %v1100
        %v1102 = vsel %vm895, %v1099, 0.0
        %1103 = vadd.xlane.f32.xlu0 %v1102
        %v1104 = vpop.xlane.xlu0 %1103
        %v1105 = vsel %vm895, %v1101, 0.0
        %1106 = vadd.xlane.f32.xlu0 %v1105
        %v1107 = vpop.xlane.xlu0 %1106
        %v1108 = vrcp.pop %v1104
        %v1109 = vrcp.pop %v1107
        %v1110 = vmul.f32 %v1099, %v1108
        %v1111 = vmul.f32 %v1101, %v1109
        %1114 = vrot.lane.b32.xlu0 %v797, 120
        %v1115 = vpop.permute.xlu0 %1114
        %1116 = vrot.lane.b32.xlu0 %v802, 120
        %v1117 = vpop.permute.xlu0 %1116
        %v1121 = vsel %vm895, %v1110, 0
        %v1124 = vsel %vm895, %v1111, 0
        %1126 = vmatprep.subr.mxu0 0.0
        %1127 = vmatpush1.msra.mxu0 %v1115
        %1128 = vmatprep.subr.mxu0 0.0
        %1129 = vmatpush1.msra.mxu0 %v1117
        %1130 = vmatprep.subr.mxu0 0.0
        %1131 = vmatpush1.msra.mxu0 0.0
        %1132 = vmatprep.subr.mxu0 0.0
        %1133 = vmatpush1.msra.mxu0 0.0
        %1134 = vmatprep.subr.mxu0 0.0
        %1135 = vmatpush1.msra.mxu0 0.0
        %1136 = vmatprep.subr.mxu0 0.0
        %1137 = vmatpush1.msra.mxu0 0.0
        %1138 = vmatprep.subr.mxu0 0.0
        %1139 = vmatpush1.msra.mxu0 0.0
        %1140 = vmatprep.subr.mxu0 0.0
        %1141 = vmatpush1.msra.mxu0 0.0
        %1142 = vmatprep.subr.mxu0 0.0
        %1143 = vmatpush1.msra.mxu0 0.0
        %1144 = vmatprep.subr.mxu0 0.0
        %1145 = vmatpush1.msra.mxu0 0.0
        %1146 = vmatprep.subr.mxu0 0.0
        %1147 = vmatpush1.msra.mxu0 0.0
        %1148 = vmatprep.subr.mxu0 0.0
        %1149 = vmatpush1.msra.mxu0 0.0
        %1150 = vmatprep.subr.mxu0 0.0
        %1151 = vmatpush1.msra.mxu0 0.0
        %1152 = vmatprep.subr.mxu0 0.0
        %1153 = vmatpush1.msra.mxu0 0.0
        %1154 = vmatprep.subr.mxu0 0.0
        %1155 = vmatpush1.msra.mxu0 0.0
        %1156 = vmatprep.subr.mxu0 0.0
        %1157 = vmatpush1.msra.mxu0 0.0
        %1158 = vmatprep.subr.mxu0 0.0
        %1159 = vmatpush1.msra.mxu0 0.0
        %1160 = vmatprep.subr.mxu0 0.0
        %1161 = vmatpush1.msra.mxu0 0.0
        %1162 = vmatprep.subr.mxu0 0.0
        %1163 = vmatpush1.msra.mxu0 0.0
        %1164 = vmatprep.subr.mxu0 0.0
        %1165 = vmatpush1.msra.mxu0 0.0
        %1166 = vmatprep.subr.mxu0 0.0
        %1167 = vmatpush1.msra.mxu0 0.0
        %1168 = vmatprep.subr.mxu0 0.0
        %1169 = vmatpush1.msra.mxu0 0.0
        %1170 = vmatprep.subr.mxu0 0.0
        %1171 = vmatpush1.msra.mxu0 0.0
        %1172 = vmatprep.subr.mxu0 0.0
        %1173 = vmatpush1.msra.mxu0 0.0
        %1174 = vmatprep.subr.mxu0 0.0
        %1175 = vmatpush1.msra.mxu0 0.0
        %1176 = vmatprep.subr.mxu0 0.0
        %1177 = vmatpush1.msra.mxu0 0.0
        %1178 = vmatprep.subr.mxu0 0.0
        %1179 = vmatpush1.msra.mxu0 0.0
        %1180 = vmatprep.subr.mxu0 0.0
        %1181 = vmatpush1.msra.mxu0 0.0
        %1182 = vmatprep.subr.mxu0 0.0
        %1183 = vmatpush1.msra.mxu0 0.0
        %1184 = vmatprep.subr.mxu0 0.0
        %1185 = vmatpush1.msra.mxu0 0.0
        %1186 = vmatprep.subr.mxu0 0.0
        %1187 = vmatpush1.msra.mxu0 0.0
        %1188 = vmatprep.subr.mxu0 0.0
        %1189 = vmatpush1.msra.mxu0 0.0
        %1190 = vmatprep.mubr.f32.mxu0 0.0
        %1191 = vmatmul.mubr.f32.gmra.mrb[0].mxu0 %v1121
        %v1192 = vpop.f32.mrb[0].mxu0
        %v1193 = vadd.f32 0.0, %v1192
        %v1194 = vpop.f32.mrb[0].mxu0
        %1195 = vmatprep.mubr.f32.mxu0 0.0
        %1196 = vmatmul.mubr.f32.gmra.mrb[0].mxu0 %v1124
        %v1197 = vpop.f32.mrb[0].mxu0
        %v1198 = vadd.f32 0.0, %v1197
        %v1199 = vpop.f32.mrb[0].mxu0
        %1200 = vdwg.mxu0
        %1201 = vrot.lane.b32.xlu0 %v805, 112
        %v1202 = vpop.permute.xlu0 %1201
        %1203 = vrot.lane.b32.xlu0 %v806, 112
        %v1204 = vpop.permute.xlu0 %1203
        %1205 = vrot.lane.b32.xlu0 %v711, 112
        %v1206 = vpop.permute.xlu0 %1205
        %1207 = vrot.lane.b32.xlu0 %v716, 112
        %v1208 = vpop.permute.xlu0 %1207
        %v1209 = vsel %vm807, %v1202, 0
        %v1211 = vsel %vm807, %v1204, 0
        %v1213 = vsel %vm807, %v1206, 0
        %v1215 = vsel %vm807, %v1208, 0
        %1217 = vmatprep.subr.mxu0 0.0
        %1218 = vmatpush1.xpose.msra.mxu0 %v1213
        %1219 = vmatprep.subr.mxu0 0.0
        %1220 = vmatpush1.xpose.msra.mxu0 %v1215
        %1221 = vmatprep.subr.mxu0 0.0
        %1222 = vmatpush1.xpose.msra.mxu0 0.0
        %1223 = vmatprep.subr.mxu0 0.0
        %1224 = vmatpush1.xpose.msra.mxu0 0.0
        %1225 = vmatprep.subr.mxu0 0.0
        %1226 = vmatpush1.xpose.msra.mxu0 0.0
        %1227 = vmatprep.subr.mxu0 0.0
        %1228 = vmatpush1.xpose.msra.mxu0 0.0
        %1229 = vmatprep.subr.mxu0 0.0
        %1230 = vmatpush1.xpose.msra.mxu0 0.0
        %1231 = vmatprep.subr.mxu0 0.0
        %1232 = vmatpush1.xpose.msra.mxu0 0.0
        %1233 = vmatprep.subr.mxu0 0.0
        %1234 = vmatpush1.xpose.msra.mxu0 0.0
        %1235 = vmatprep.subr.mxu0 0.0
        %1236 = vmatpush1.xpose.msra.mxu0 0.0
        %1237 = vmatprep.subr.mxu0 0.0
        %1238 = vmatpush1.xpose.msra.mxu0 0.0
        %1239 = vmatprep.subr.mxu0 0.0
        %1240 = vmatpush1.xpose.msra.mxu0 0.0
        %1241 = vmatprep.subr.mxu0 0.0
        %1242 = vmatpush1.xpose.msra.mxu0 0.0
        %1243 = vmatprep.subr.mxu0 0.0
        %1244 = vmatpush1.xpose.msra.mxu0 0.0
        %1245 = vmatprep.subr.mxu0 0.0
        %1246 = vmatpush1.xpose.msra.mxu0 0.0
        %1247 = vmatprep.subr.mxu0 0.0
        %1248 = vmatpush1.xpose.msra.mxu0 0.0
        %1249 = vmatprep.subr.mxu0 0.0
        %1250 = vmatpush1.xpose.msra.mxu0 0.0
        %1251 = vmatprep.subr.mxu0 0.0
        %1252 = vmatpush1.xpose.msra.mxu0 0.0
        %1253 = vmatprep.subr.mxu0 0.0
        %1254 = vmatpush1.xpose.msra.mxu0 0.0
        %1255 = vmatprep.subr.mxu0 0.0
        %1256 = vmatpush1.xpose.msra.mxu0 0.0
        %1257 = vmatprep.subr.mxu0 0.0
        %1258 = vmatpush1.xpose.msra.mxu0 0.0
        %1259 = vmatprep.subr.mxu0 0.0
        %1260 = vmatpush1.xpose.msra.mxu0 0.0
        %1261 = vmatprep.subr.mxu0 0.0
        %1262 = vmatpush1.xpose.msra.mxu0 0.0
        %1263 = vmatprep.subr.mxu0 0.0
        %1264 = vmatpush1.xpose.msra.mxu0 0.0
        %1265 = vmatprep.subr.mxu0 0.0
        %1266 = vmatpush1.xpose.msra.mxu0 0.0
        %1267 = vmatprep.subr.mxu0 0.0
        %1268 = vmatpush1.xpose.msra.mxu0 0.0
        %1269 = vmatprep.subr.mxu0 0.0
        %1270 = vmatpush1.xpose.msra.mxu0 0.0
        %1271 = vmatprep.subr.mxu0 0.0
        %1272 = vmatpush1.xpose.msra.mxu0 0.0
        %1273 = vmatprep.subr.mxu0 0.0
        %1274 = vmatpush1.xpose.msra.mxu0 0.0
        %1275 = vmatprep.subr.mxu0 0.0
        %1276 = vmatpush1.xpose.msra.mxu0 0.0
        %1277 = vmatprep.subr.mxu0 0.0
        %1278 = vmatpush1.xpose.msra.mxu0 0.0
        %1279 = vmatprep.subr.mxu0 0.0
        %1280 = vmatpush1.xpose.msra.mxu0 0.0
        %1281 = vmatprep.mubr.f32.mxu0 0.0
        %1282 = vmatmul.mubr.f32.gmra.mrb[0].mxu0 %v1209
        %v1283 = vpop.f32.mrb[0].mxu0
        %v1284 = vadd.f32 0.0, %v1283
        %v1285 = vpop.f32.mrb[0].mxu0
        %1286 = vmatprep.mubr.f32.mxu0 0.0
        %1287 = vmatmul.mubr.f32.gmra.mrb[0].mxu0 %v1211
        %v1288 = vpop.f32.mrb[0].mxu0
        %v1289 = vadd.f32 0.0, %v1288
        %v1290 = vpop.f32.mrb[0].mxu0
        %1291 = vdwg.mxu0
        %v1292 = vsel %vm895, %v1284, -inf
        %1293 = vmax.xlane.f32.xlu0 %v1292
        %v1294 = vpop.xlane.xlu0 %1293
        %v1295 = vsel %vm895, %v1289, -inf
        %1296 = vmax.xlane.f32.xlu0 %v1295
        %v1297 = vpop.xlane.xlu0 %1296
        %v1298 = vsub.f32 %v1284, %v1294
        %v1299 = vsub.f32 %v1289, %v1297
        %v1300 = vmul.f32 %v1298, 1.442695
        %v1301 = vpow.pop %v1300
        %v1302 = vmul.f32 %v1299, 1.442695
        %v1303 = vpow.pop %v1302
        %v1304 = vsel %vm895, %v1301, 0.0
        %1305 = vadd.xlane.f32.xlu0 %v1304
        %v1306 = vpop.xlane.xlu0 %1305
        %v1307 = vsel %vm895, %v1303, 0.0
        %1308 = vadd.xlane.f32.xlu0 %v1307
        %v1309 = vpop.xlane.xlu0 %1308
        %v1310 = vrcp.pop %v1306
        %v1311 = vrcp.pop %v1309
        %v1312 = vmul.f32 %v1301, %v1310
        %v1313 = vmul.f32 %v1303, %v1311
        %1314 = vrot.lane.b32.xlu0 %v797, 112
        %v1315 = vpop.permute.xlu0 %1314
        %1316 = vrot.lane.b32.xlu0 %v802, 112
        %v1317 = vpop.permute.xlu0 %1316
        %v1321 = vsel %vm895, %v1312, 0
        %v1324 = vsel %vm895, %v1313, 0
        %1326 = vmatprep.subr.mxu0 0.0
        %1327 = vmatpush1.msra.mxu0 %v1315
        %1328 = vmatprep.subr.mxu0 0.0
        %1329 = vmatpush1.msra.mxu0 %v1317
        %1330 = vmatprep.subr.mxu0 0.0
        %1331 = vmatpush1.msra.mxu0 0.0
        %1332 = vmatprep.subr.mxu0 0.0
        %1333 = vmatpush1.msra.mxu0 0.0
        %1334 = vmatprep.subr.mxu0 0.0
        %1335 = vmatpush1.msra.mxu0 0.0
        %1336 = vmatprep.subr.mxu0 0.0
        %1337 = vmatpush1.msra.mxu0 0.0
        %1338 = vmatprep.subr.mxu0 0.0
        %1339 = vmatpush1.msra.mxu0 0.0
        %1340 = vmatprep.subr.mxu0 0.0
        %1341 = vmatpush1.msra.mxu0 0.0
        %1342 = vmatprep.subr.mxu0 0.0
        %1343 = vmatpush1.msra.mxu0 0.0
        %1344 = vmatprep.subr.mxu0 0.0
        %1345 = vmatpush1.msra.mxu0 0.0
        %1346 = vmatprep.subr.mxu0 0.0
        %1347 = vmatpush1.msra.mxu0 0.0
        %1348 = vmatprep.subr.mxu0 0.0
        %1349 = vmatpush1.msra.mxu0 0.0
        %1350 = vmatprep.subr.mxu0 0.0
        %1351 = vmatpush1.msra.mxu0 0.0
        %1352 = vmatprep.subr.mxu0 0.0
        %1353 = vmatpush1.msra.mxu0 0.0
        %1354 = vmatprep.subr.mxu0 0.0
        %1355 = vmatpush1.msra.mxu0 0.0
        %1356 = vmatprep.subr.mxu0 0.0
        %1357 = vmatpush1.msra.mxu0 0.0
        %1358 = vmatprep.subr.mxu0 0.0
        %1359 = vmatpush1.msra.mxu0 0.0
        %1360 = vmatprep.subr.mxu0 0.0
        %1361 = vmatpush1.msra.mxu0 0.0
        %1362 = vmatprep.subr.mxu0 0.0
        %1363 = vmatpush1.msra.mxu0 0.0
        %1364 = vmatprep.subr.mxu0 0.0
        %1365 = vmatpush1.msra.mxu0 0.0
        %1366 = vmatprep.subr.mxu0 0.0
        %1367 = vmatpush1.msra.mxu0 0.0
        %1368 = vmatprep.subr.mxu0 0.0
        %1369 = vmatpush1.msra.mxu0 0.0
        %1370 = vmatprep.subr.mxu0 0.0
        %1371 = vmatpush1.msra.mxu0 0.0
        %1372 = vmatprep.subr.mxu0 0.0
        %1373 = vmatpush1.msra.mxu0 0.0
        %1374 = vmatprep.subr.mxu0 0.0
        %1375 = vmatpush1.msra.mxu0 0.0
        %1376 = vmatprep.subr.mxu0 0.0
        %1377 = vmatpush1.msra.mxu0 0.0
        %1378 = vmatprep.subr.mxu0 0.0
        %1379 = vmatpush1.msra.mxu0 0.0
        %1380 = vmatprep.subr.mxu0 0.0
        %1381 = vmatpush1.msra.mxu0 0.0
        %1382 = vmatprep.subr.mxu0 0.0
        %1383 = vmatpush1.msra.mxu0 0.0
        %1384 = vmatprep.subr.mxu0 0.0
        %1385 = vmatpush1.msra.mxu0 0.0
        %1386 = vmatprep.subr.mxu0 0.0
        %1387 = vmatpush1.msra.mxu0 0.0
        %1388 = vmatprep.subr.mxu0 0.0
        %1389 = vmatpush1.msra.mxu0 0.0
        %1390 = vmatprep.mubr.f32.mxu0 0.0
        %1391 = vmatmul.mubr.f32.gmra.mrb[0].mxu0 %v1321
        %v1392 = vpop.f32.mrb[0].mxu0
        %v1393 = vadd.f32 0.0, %v1392
        %v1394 = vpop.f32.mrb[0].mxu0
        %1395 = vmatprep.mubr.f32.mxu0 0.0
        %1396 = vmatmul.mubr.f32.gmra.mrb[0].mxu0 %v1324
        %v1397 = vpop.f32.mrb[0].mxu0
        %v1398 = vadd.f32 0.0, %v1397
        %v1399 = vpop.f32.mrb[0].mxu0
        %1400 = vdwg.mxu0
        %1401 = vrot.lane.b32.xlu0 %v805, 104
        %v1402 = vpop.permute.xlu0 %1401
        %1403 = vrot.lane.b32.xlu0 %v806, 104
        %v1404 = vpop.permute.xlu0 %1403
        %1405 = vrot.lane.b32.xlu0 %v711, 104
        %v1406 = vpop.permute.xlu0 %1405
        %1407 = vrot.lane.b32.xlu0 %v716, 104
        %v1408 = vpop.permute.xlu0 %1407
        %v1409 = vsel %vm807, %v1402, 0
        %v1411 = vsel %vm807, %v1404, 0
        %v1413 = vsel %vm807, %v1406, 0
        %v1415 = vsel %vm807, %v1408, 0
        %1417 = vmatprep.subr.mxu0 0.0
        %1418 = vmatpush1.xpose.msra.mxu0 %v1413
        %1419 = vmatprep.subr.mxu0 0.0
        %1420 = vmatpush1.xpose.msra.mxu0 %v1415
        %1421 = vmatprep.subr.mxu0 0.0
        %1422 = vmatpush1.xpose.msra.mxu0 0.0
        %1423 = vmatprep.subr.mxu0 0.0
        %1424 = vmatpush1.xpose.msra.mxu0 0.0
        %1425 = vmatprep.subr.mxu0 0.0
        %1426 = vmatpush1.xpose.msra.mxu0 0.0
        %1427 = vmatprep.subr.mxu0 0.0
        %1428 = vmatpush1.xpose.msra.mxu0 0.0
        %1429 = vmatprep.subr.mxu0 0.0
        %1430 = vmatpush1.xpose.msra.mxu0 0.0
        %1431 = vmatprep.subr.mxu0 0.0
        %1432 = vmatpush1.xpose.msra.mxu0 0.0
        %1433 = vmatprep.subr.mxu0 0.0
        %1434 = vmatpush1.xpose.msra.mxu0 0.0
        %1435 = vmatprep.subr.mxu0 0.0
        %1436 = vmatpush1.xpose.msra.mxu0 0.0
        %1437 = vmatprep.subr.mxu0 0.0
        %1438 = vmatpush1.xpose.msra.mxu0 0.0
        %1439 = vmatprep.subr.mxu0 0.0
        %1440 = vmatpush1.xpose.msra.mxu0 0.0
        %1441 = vmatprep.subr.mxu0 0.0
        %1442 = vmatpush1.xpose.msra.mxu0 0.0
        %1443 = vmatprep.subr.mxu0 0.0
        %1444 = vmatpush1.xpose.msra.mxu0 0.0
        %1445 = vmatprep.subr.mxu0 0.0
        %1446 = vmatpush1.xpose.msra.mxu0 0.0
        %1447 = vmatprep.subr.mxu0 0.0
        %1448 = vmatpush1.xpose.msra.mxu0 0.0
        %1449 = vmatprep.subr.mxu0 0.0
        %1450 = vmatpush1.xpose.msra.mxu0 0.0
        %1451 = vmatprep.subr.mxu0 0.0
        %1452 = vmatpush1.xpose.msra.mxu0 0.0
        %1453 = vmatprep.subr.mxu0 0.0
        %1454 = vmatpush1.xpose.msra.mxu0 0.0
        %1455 = vmatprep.subr.mxu0 0.0
        %1456 = vmatpush1.xpose.msra.mxu0 0.0
        %1457 = vmatprep.subr.mxu0 0.0
        %1458 = vmatpush1.xpose.msra.mxu0 0.0
        %1459 = vmatprep.subr.mxu0 0.0
        %1460 = vmatpush1.xpose.msra.mxu0 0.0
        %1461 = vmatprep.subr.mxu0 0.0
        %1462 = vmatpush1.xpose.msra.mxu0 0.0
        %1463 = vmatprep.subr.mxu0 0.0
        %1464 = vmatpush1.xpose.msra.mxu0 0.0
        %1465 = vmatprep.subr.mxu0 0.0
        %1466 = vmatpush1.xpose.msra.mxu0 0.0
        %1467 = vmatprep.subr.mxu0 0.0
        %1468 = vmatpush1.xpose.msra.mxu0 0.0
        %1469 = vmatprep.subr.mxu0 0.0
        %1470 = vmatpush1.xpose.msra.mxu0 0.0
        %1471 = vmatprep.subr.mxu0 0.0
        %1472 = vmatpush1.xpose.msra.mxu0 0.0
        %1473 = vmatprep.subr.mxu0 0.0
        %1474 = vmatpush1.xpose.msra.mxu0 0.0
        %1475 = vmatprep.subr.mxu0 0.0
        %1476 = vmatpush1.xpose.msra.mxu0 0.0
        %1477 = vmatprep.subr.mxu0 0.0
        %1478 = vmatpush1.xpose.msra.mxu0 0.0
        %1479 = vmatprep.subr.mxu0 0.0
        %1480 = vmatpush1.xpose.msra.mxu0 0.0
        %1481 = vmatprep.mubr.f32.mxu0 0.0
        %1482 = vmatmul.mubr.f32.gmra.mrb[0].mxu0 %v1409
        %v1483 = vpop.f32.mrb[0].mxu0
        %v1484 = vadd.f32 0.0, %v1483
        %v1485 = vpop.f32.mrb[0].mxu0
        %1486 = vmatprep.mubr.f32.mxu0 0.0
        %1487 = vmatmul.mubr.f32.gmra.mrb[0].mxu0 %v1411
        %v1488 = vpop.f32.mrb[0].mxu0
        %v1489 = vadd.f32 0.0, %v1488
        %v1490 = vpop.f32.mrb[0].mxu0
        %1491 = vdwg.mxu0
        %v1492 = vsel %vm895, %v1484, -inf
        %1493 = vmax.xlane.f32.xlu0 %v1492
        %v1494 = vpop.xlane.xlu0 %1493
        %v1495 = vsel %vm895, %v1489, -inf
        %1496 = vmax.xlane.f32.xlu0 %v1495
        %v1497 = vpop.xlane.xlu0 %1496
        %v1498 = vsub.f32 %v1484, %v1494
        %v1499 = vsub.f32 %v1489, %v1497
        %v1500 = vmul.f32 %v1498, 1.442695
        %v1501 = vpow.pop %v1500
        %v1502 = vmul.f32 %v1499, 1.442695
        %v1503 = vpow.pop %v1502
        %v1504 = vsel %vm895, %v1501, 0.0
        %1505 = vadd.xlane.f32.xlu0 %v1504
        %v1506 = vpop.xlane.xlu0 %1505
        %v1507 = vsel %vm895, %v1503, 0.0
        %1508 = vadd.xlane.f32.xlu0 %v1507
        %v1509 = vpop.xlane.xlu0 %1508
        %v1510 = vrcp.pop %v1506
        %v1511 = vrcp.pop %v1509
        %v1512 = vmul.f32 %v1501, %v1510
        %v1513 = vmul.f32 %v1503, %v1511
        %1514 = vrot.lane.b32.xlu0 %v797, 104
        %v1515 = vpop.permute.xlu0 %1514
        %1516 = vrot.lane.b32.xlu0 %v802, 104
        %v1517 = vpop.permute.xlu0 %1516
        %v1521 = vsel %vm895, %v1512, 0
        %v1524 = vsel %vm895, %v1513, 0
        %1526 = vmatprep.subr.mxu0 0.0
        %1527 = vmatpush1.msra.mxu0 %v1515
        %1528 = vmatprep.subr.mxu0 0.0
        %1529 = vmatpush1.msra.mxu0 %v1517
        %1530 = vmatprep.subr.mxu0 0.0
        %1531 = vmatpush1.msra.mxu0 0.0
        %1532 = vmatprep.subr.mxu0 0.0
        %1533 = vmatpush1.msra.mxu0 0.0
        %1534 = vmatprep.subr.mxu0 0.0
        %1535 = vmatpush1.msra.mxu0 0.0
        %1536 = vmatprep.subr.mxu0 0.0
        %1537 = vmatpush1.msra.mxu0 0.0
        %1538 = vmatprep.subr.mxu0 0.0
        %1539 = vmatpush1.msra.mxu0 0.0
        %1540 = vmatprep.subr.mxu0 0.0
        %1541 = vmatpush1.msra.mxu0 0.0
        %1542 = vmatprep.subr.mxu0 0.0
        %1543 = vmatpush1.msra.mxu0 0.0
        %1544 = vmatprep.subr.mxu0 0.0
        %1545 = vmatpush1.msra.mxu0 0.0
        %1546 = vmatprep.subr.mxu0 0.0
        %1547 = vmatpush1.msra.mxu0 0.0
        %1548 = vmatprep.subr.mxu0 0.0
        %1549 = vmatpush1.msra.mxu0 0.0
        %1550 = vmatprep.subr.mxu0 0.0
        %1551 = vmatpush1.msra.mxu0 0.0
        %1552 = vmatprep.subr.mxu0 0.0
        %1553 = vmatpush1.msra.mxu0 0.0
        %1554 = vmatprep.subr.mxu0 0.0
        %1555 = vmatpush1.msra.mxu0 0.0
        %1556 = vmatprep.subr.mxu0 0.0
        %1557 = vmatpush1.msra.mxu0 0.0
        %1558 = vmatprep.subr.mxu0 0.0
        %1559 = vmatpush1.msra.mxu0 0.0
        %1560 = vmatprep.subr.mxu0 0.0
        %1561 = vmatpush1.msra.mxu0 0.0
        %1562 = vmatprep.subr.mxu0 0.0
        %1563 = vmatpush1.msra.mxu0 0.0
        %1564 = vmatprep.subr.mxu0 0.0
        %1565 = vmatpush1.msra.mxu0 0.0
        %1566 = vmatprep.subr.mxu0 0.0
        %1567 = vmatpush1.msra.mxu0 0.0
        %1568 = vmatprep.subr.mxu0 0.0
        %1569 = vmatpush1.msra.mxu0 0.0
        %1570 = vmatprep.subr.mxu0 0.0
        %1571 = vmatpush1.msra.mxu0 0.0
        %1572 = vmatprep.subr.mxu0 0.0
        %1573 = vmatpush1.msra.mxu0 0.0
        %1574 = vmatprep.subr.mxu0 0.0
        %1575 = vmatpush1.msra.mxu0 0.0
        %1576 = vmatprep.subr.mxu0 0.0
        %1577 = vmatpush1.msra.mxu0 0.0
        %1578 = vmatprep.subr.mxu0 0.0
        %1579 = vmatpush1.msra.mxu0 0.0
        %1580 = vmatprep.subr.mxu0 0.0
        %1581 = vmatpush1.msra.mxu0 0.0
        %1582 = vmatprep.subr.mxu0 0.0
        %1583 = vmatpush1.msra.mxu0 0.0
        %1584 = vmatprep.subr.mxu0 0.0
        %1585 = vmatpush1.msra.mxu0 0.0
        %1586 = vmatprep.subr.mxu0 0.0
        %1587 = vmatpush1.msra.mxu0 0.0
        %1588 = vmatprep.subr.mxu0 0.0
        %1589 = vmatpush1.msra.mxu0 0.0
        %1590 = vmatprep.mubr.f32.mxu0 0.0
        %1591 = vmatmul.mubr.f32.gmra.mrb[0].mxu0 %v1521
        %v1592 = vpop.f32.mrb[0].mxu0
        %v1593 = vadd.f32 0.0, %v1592
        %v1594 = vpop.f32.mrb[0].mxu0
        %1595 = vmatprep.mubr.f32.mxu0 0.0
        %1596 = vmatmul.mubr.f32.gmra.mrb[0].mxu0 %v1524
        %v1597 = vpop.f32.mrb[0].mxu0
        %v1598 = vadd.f32 0.0, %v1597
        %v1599 = vpop.f32.mrb[0].mxu0
        %1600 = vdwg.mxu0
        %1603 = vrot.lane.b32.xlu0 %v1193, 8
        %v1604 = vpop.permute.xlu0 %1603
        %1605 = vrot.lane.b32.xlu0 %v1198, 8
        %v1606 = vpop.permute.xlu0 %1605
        %1611 = vrot.lane.b32.xlu0 %v1393, 16
        %v1612 = vpop.permute.xlu0 %1611
        %1613 = vrot.lane.b32.xlu0 %v1398, 16
        %v1614 = vpop.permute.xlu0 %1613
        %1619 = vrot.lane.b32.xlu0 %v1593, 24
        %v1620 = vpop.permute.xlu0 %1619
        %1621 = vrot.lane.b32.xlu0 %v1598, 24
        %v1622 = vpop.permute.xlu0 %1621
        %v1625 = vsel %vm807, %v991, %v1604
        %v1626 = vsel %vm807, %v996, %v1606
        %v1627 = vsel %vm895, %v1625, %v1612
        %v1628 = vsel %vm895, %v1626, %v1614
        %vm1629 = vcmask 195584
        %v1630 = vsel %vm1629, %v1627, %v1620
        %v1631 = vsel %vm1629, %v1628, %v1622
        %v1632 = vld [vmem:[#allocation10] sm:$0xff]
        %v1633 = vld [vmem:[#allocation10 + $0x8] sm:$0xff]
        %v1634 = vld [vmem:[#allocation10 + $0x10] sm:$0xff]
        %v1635 = vld [vmem:[#allocation10 + $0x18] sm:$0xff]
        %v1637 = vsel %vm551, %v1630, 0
        %v1640 = vsel %vm551, %v1631, 0
        %1642 = vmatprep.subr.mxu0 0.0
        %1643 = vmatpush1.msra.mxu0 %v1632
        %1644 = vmatprep.subr.mxu0 0.0
        %1645 = vmatpush1.msra.mxu0 %v1633
        %1646 = vmatprep.subr.mxu0 0.0
        %1647 = vmatpush1.msra.mxu0 %v1634
        %1648 = vmatprep.subr.mxu0 0.0
        %1649 = vmatpush1.msra.mxu0 %v1635
        %1650 = vmatprep.subr.mxu0 0.0
        %1651 = vmatpush1.msra.mxu0 0.0
        %1652 = vmatprep.subr.mxu0 0.0
        %1653 = vmatpush1.msra.mxu0 0.0
        %1654 = vmatprep.subr.mxu0 0.0
        %1655 = vmatpush1.msra.mxu0 0.0
        %1656 = vmatprep.subr.mxu0 0.0
        %1657 = vmatpush1.msra.mxu0 0.0
        %1658 = vmatprep.subr.mxu0 0.0
        %1659 = vmatpush1.msra.mxu0 0.0
        %1660 = vmatprep.subr.mxu0 0.0
        %1661 = vmatpush1.msra.mxu0 0.0
        %1662 = vmatprep.subr.mxu0 0.0
        %1663 = vmatpush1.msra.mxu0 0.0
        %1664 = vmatprep.subr.mxu0 0.0
        %1665 = vmatpush1.msra.mxu0 0.0
        %1666 = vmatprep.subr.mxu0 0.0
        %1667 = vmatpush1.msra.mxu0 0.0
        %1668 = vmatprep.subr.mxu0 0.0
        %1669 = vmatpush1.msra.mxu0 0.0
        %1670 = vmatprep.subr.mxu0 0.0
        %1671 = vmatpush1.msra.mxu0 0.0
        %1672 = vmatprep.subr.mxu0 0.0
        %1673 = vmatpush1.msra.mxu0 0.0
        %1674 = vmatprep.subr.mxu0 0.0
        %1675 = vmatpush1.msra.mxu0 0.0
        %1676 = vmatprep.subr.mxu0 0.0
        %1677 = vmatpush1.msra.mxu0 0.0
        %1678 = vmatprep.subr.mxu0 0.0
        %1679 = vmatpush1.msra.mxu0 0.0
        %1680 = vmatprep.subr.mxu0 0.0
        %1681 = vmatpush1.msra.mxu0 0.0
        %1682 = vmatprep.subr.mxu0 0.0
        %1683 = vmatpush1.msra.mxu0 0.0
        %1684 = vmatprep.subr.mxu0 0.0
        %1685 = vmatpush1.msra.mxu0 0.0
        %1686 = vmatprep.subr.mxu0 0.0
        %1687 = vmatpush1.msra.mxu0 0.0
        %1688 = vmatprep.subr.mxu0 0.0
        %1689 = vmatpush1.msra.mxu0 0.0
        %1690 = vmatprep.subr.mxu0 0.0
        %1691 = vmatpush1.msra.mxu0 0.0
        %1692 = vmatprep.subr.mxu0 0.0
        %1693 = vmatpush1.msra.mxu0 0.0
        %1694 = vmatprep.subr.mxu0 0.0
        %1695 = vmatpush1.msra.mxu0 0.0
        %1696 = vmatprep.subr.mxu0 0.0
        %1697 = vmatpush1.msra.mxu0 0.0
        %1698 = vmatprep.subr.mxu0 0.0
        %1699 = vmatpush1.msra.mxu0 0.0
        %1700 = vmatprep.subr.mxu0 0.0
        %1701 = vmatpush1.msra.mxu0 0.0
        %1702 = vmatprep.subr.mxu0 0.0
        %1703 = vmatpush1.msra.mxu0 0.0
        %1704 = vmatprep.subr.mxu0 0.0
        %1705 = vmatpush1.msra.mxu0 0.0
        %1706 = vmatprep.mubr.f32.mxu0 0.0
        %1707 = vmatmul.mubr.f32.gmra.mrb[0].mxu0 %v1637
        %v1708 = vpop.f32.mrb[0].mxu0
        %v1709 = vadd.f32 0.0, %v1708
        %v1710 = vpop.f32.mrb[0].mxu0
        %1711 = vmatprep.mubr.f32.mxu0 0.0
        %1712 = vmatmul.mubr.f32.gmra.mrb[0].mxu0 %v1640
        %v1713 = vpop.f32.mrb[0].mxu0
        %v1714 = vadd.f32 0.0, %v1713
        %v1715 = vpop.f32.mrb[0].mxu0
        %1716 = vdwg.mxu0
        %v1717 = vadd.f32 %v538, %v1709
        %v1718 = vadd.f32 %v539, %v1714
        %v1719 = vld [vmem:[#allocation16] sm:$0x1]
        %v1721 = vlaneseq
        %v1722 = vshrl.u32 %v1721, 7
        %v1723 = vsub.s32 0, %v1722
        %v1724 = vrot.slane %v1719, %v1723
        %v1726 = vadd.f32 %v1717, %v1724
        %v1727 = vadd.f32 %v1718, %v1724
        %v1728 = vsel %vm551, %v1726, 0.0
        %1729 = vadd.xlane.f32.xlu0 %v1728
        %v1730 = vpop.xlane.xlu0 %1729
        %v1731 = vsel %vm551, %v1727, 0.0
        %1732 = vadd.xlane.f32.xlu0 %v1731
        %v1733 = vpop.xlane.xlu0 %1732
        %v1734 = vrcp.pop 32.0
        %v1735 = vmul.f32 %v1730, %v1734
        %v1736 = vmul.f32 %v1733, %v1734
        %v1737 = vsub.f32 %v1726, %v1735
        %v1738 = vsub.f32 %v1727, %v1736
        %v1739 = vmul.f32 %v1737, %v1737
        %v1740 = vmul.f32 %v1738, %v1738
        %v1741 = vsel %vm551, %v1739, 0.0
        %1742 = vadd.xlane.f32.xlu0 %v1741
        %v1743 = vpop.xlane.xlu0 %1742
        %v1744 = vsel %vm551, %v1740, 0.0
        %1745 = vadd.xlane.f32.xlu0 %v1744
        %v1746 = vpop.xlane.xlu0 %1745
        %v1747 = vmul.f32 %v1743, 0.032258064
        %v1748 = vmul.f32 %v1746, 0.032258064
        %v1749 = vrsqrt.pop %v1747
        %v1750 = vmul.f32 %v1747, %v1749
        %vm1751 = vcmp.eq.f32.partialorder %v1747, inf
        %v1752 = vsel %vm1751, %v1747, %v1750
        %vm1753 = vcmp.eq.f32.partialorder %v1747, 0.0
        %v1754 = vand.u32 %v1747, 2147483648
        %v1755 = vsel %vm1753, %v1754, %v1752
        %v1756 = vrsqrt.pop %v1748
        %v1757 = vmul.f32 %v1748, %v1756
        %vm1758 = vcmp.eq.f32.partialorder %v1748, inf
        %v1759 = vsel %vm1758, %v1748, %v1757
        %vm1760 = vcmp.eq.f32.partialorder %v1748, 0.0
        %v1761 = vand.u32 %v1748, 2147483648
        %v1762 = vsel %vm1760, %v1761, %v1759
        %v1763 = vadd.f32 %v1755, 1e-06
        %v1764 = vadd.f32 %v1762, 1e-06
        %v1765 = vrcp.pop %v1763
        %v1766 = vmul.f32 1.0, %v1765
        %v1767 = vrcp.pop %v1764
        %v1768 = vmul.f32 1.0, %v1767
        %v1769 = vld [vmem:[#allocation19] sm:$0x1]
        %v1770 = vmul.f32 %v1737, %v1766
        %v1771 = vmul.f32 %v1738, %v1768
        %v1773 = vlaneseq
        %v1774 = vshrl.u32 %v1773, 7
        %v1775 = vsub.s32 0, %v1774
        %v1776 = vrot.slane %v1769, %v1775
        %v1778 = vmul.f32 %v1776, %v1770
        %v1779 = vmul.f32 %v1776, %v1771
        %v1780 = vld [vmem:[#allocation17] sm:$0x1]
        %v1782 = vlaneseq
        %v1783 = vshrl.u32 %v1782, 7
        %v1784 = vsub.s32 0, %v1783
        %v1785 = vrot.slane %v1780, %v1784
        %v1787 = vadd.f32 %v1778, %v1785
        %v1788 = vadd.f32 %v1779, %v1785
        %1789 = vst.msk [vmem:[%s537] sm:$0xff] %vm551, %v1787
        %1790 = vst.msk [vmem:[%s537 + $0x8] sm:$0xff] %vm551, %v1788
        %s1791 = sand.u32 %s277, 1
        %s1792 = scalar_lea.sflag [#allocation4], %s1791
        %s1793 = sand.u32 %s277, 1
        %s1794 = smul.addr %s1793, 16
        %s1795 = scalar_lea.vmem [#allocation20], %s1794
        // Predicated region
        $region109: #{tpu_custom_call.1} parent=63 // pred_check
          %p1796 = pneg %p287
        $region110: #{tpu_custom_call.1} parent=63 // pred_check_branch
          %1798 = sbr.rel (%p1796) target = $region112
        $region111: #{tpu_custom_call.1} parent=63 // pred_region
          %s1800 = ssub.s32 256, 256
          %1801 = vsyncadd %s1792, %s1800
          %s1802 = smul.addr %s33, 2
          %s1803 = smul.addr %s1802, 128
          %s1804 = scalar_lea.hbm %s11, %s1803
          %s1805 = sshll.u32 %s1795, 4
          %s1806 = int_to_ptr.vmem [resolvable:$true] %s1805
          %1811 = dma.vmem_to_hbm [thread:$0]  %s1806, 256, %s1804, %s1792, 128, 128, 8
        $region112: #{tpu_custom_call.1} parent=63 // pred_fallthru
          _
      $region64: #{tpu_custom_call.1} parent=5 // pred_fallthru
        _
      %p1812 = scmp.le.s32.totalorder 2, %s28
      // Predicated region
      $region113: #{tpu_custom_call.1} parent=5 // pred_check
        %p1813 = pneg %p1812
      $region114: #{tpu_custom_call.1} parent=5 // pred_check_branch
        %1815 = sbr.rel (%p1813) target = $region116
      $region115: #{tpu_custom_call.1} parent=5 // pred_region
        %s1816 = ssub.s32 %s28, 2
        // Predicated region
        $region117: #{tpu_custom_call.1} parent=115 // pred_check
          %p1817 = pneg %p293
        $region118: #{tpu_custom_call.1} parent=115 // pred_check_branch
          %1819 = sbr.rel (%p1817) target = $region120
        $region119: #{tpu_custom_call.1} parent=115 // pred_region
          %s1820 = sand.u32 %s278, 1
          %s1821 = scalar_lea.sflag [#allocation4], %s1820
          %s1822 = sand.u32 %s278, 1
          %s1823 = smul.addr %s1822, 16
          %s1824 = scalar_lea.vmem [#allocation20], %s1823
          %1825 = dma.done %s1821, 256
        $region120: #{tpu_custom_call.1} parent=115 // pred_fallthru
          _
      $region116: #{tpu_custom_call.1} parent=5 // pred_fallthru
        _
    $region6: #{tpu_custom_call.1} parent=1 // loop_footer
      %s32 = sadd.s32 1, %s28
    $region7: #{tpu_custom_call.1} parent=1 // loop_footer_branch
      %27 = sbr.rel target = $region3
    $region8: #{tpu_custom_call.1} parent=1 // loop_exit
      _
    %1826 = vsyncpa [#allocation3], 1
    %s1827 = scalar_lea.sflag [#allocation3], 1
    %1828 = vsyncpa %s1827, 1
    %1829 = vsyncpa [#allocation6], 1
    %1830 = vsyncpa [#allocation9], 1
    %1831 = vsyncpa [#allocation12], 1
    %1832 = vsyncpa [#allocation15], 1
    %1833 = vsyncpa [#allocation18], 1
    %1834 = vsyncpa [#allocation4], 1
    %s1835 = scalar_lea.sflag [#allocation4], 1
    %1836 = vsyncpa %s1835, 1

</llo_original>
